<compile_context>
chip_gen: v7x
topology: tpu7x:2x2x1
jax: 0.10.0
libtpu: 0.0.40
codegen_flags: <defaults>
</compile_context>

<pallas_src>
import math

import numpy as np
import jax
import jax.numpy as jnp
from jax.experimental import pallas as pl
from jax.experimental.pallas import tpu as pltpu


def _bilinear_resize_matrix(in_size: int, out_size: int, scale_factor: float) -> np.ndarray:
    """Dense (out_size, in_size) matrix reproducing torch bilinear interpolation
    (nn.Upsample: mode='bilinear', align_corners=False, antialias=False)."""
    inv_scale = 1.0 / scale_factor
    mat = np.zeros((out_size, in_size), dtype=np.float32)
    for d in range(out_size):
        src = (d + 0.5) * inv_scale - 0.5
        src = max(src, 0.0)
        i0 = min(int(math.floor(src)), in_size - 1)
        i1 = min(i0 + 1, in_size - 1)
        lam = float(src - i0)
        mat[d, i0] += 1.0 - lam
        mat[d, i1] += lam
    return mat


def _upsample4_kernel(wc_ref, x_ref, ah_ref, awt_ref, o_ref):
    # wc_ref : (C, C)          SMEM, f32   1x1 conv weight (Cout, Cin)
    # x_ref  : (nb, C, H, W)   VMEM        input batch tile (NCHW)
    # ah_ref : (Ho, H)         VMEM, bf16  vertical bilinear interp matrix
    # awt_ref: (W, Wo)         VMEM, bf16  horizontal interp matrix, transposed
    # o_ref  : (nb, C, Ho, Wo) VMEM        output batch tile (NCHW)
    nb, cc, hh, ww = x_ref.shape
    ho = ah_ref.shape[0]
    wo = awt_ref.shape[1]

    x = x_ref[...]                                    # (nb, C, H, W), input dtype

    # ---- 1x1 conv (channel mix) on the small pre-upsample grid (VPU, f32) ----
    # Kept on the VPU (scalar*tile MACs, ~1-2% of total MACs) so no
    # lane-splitting relayout is needed to contract over C in NCHW layout.
    mixed = []
    for co in range(cc):
        acc = wc_ref[co, 0] * x[:, 0].astype(jnp.float32)
        for ci in range(1, cc):
            acc = acc + wc_ref[co, ci] * x[:, ci].astype(jnp.float32)
        mixed.append(acc)                             # (nb, H, W) f32
    y = jnp.stack(mixed, axis=1)                      # (nb, C, H, W) f32

    # ---- vertical bilinear interp: batched (Ho,H)@(H,W) over nb*C (MXU) ----
    yb = y.astype(jnp.bfloat16).reshape(nb * cc, hh, ww)       # leading-dim merge (free)
    ah_b = jnp.broadcast_to(ah_ref[...], (nb * cc, ho, hh))    # bf16
    t = jax.lax.dot_general(ah_b, yb,
                            (((2,), (1,)), ((0,), (0,))),
                            preferred_element_type=jnp.float32)  # (nb*C, Ho, W) f32

    # ---- horizontal bilinear interp: batched (Ho,W)@(W,Wo) over nb*C (MXU) ----
    tb = t.astype(jnp.bfloat16)
    awt_b = jnp.broadcast_to(awt_ref[...], (nb * cc, ww, wo))  # bf16
    out = jax.lax.dot_general(tb, awt_b,
                              (((2,), (1,)), ((0,), (0,))),
                              preferred_element_type=jnp.float32)  # (nb*C, Ho, Wo) f32

    # Leading-dim split (free) and one lane-oriented store of the whole tile.
    o_ref[...] = out.reshape(nb, cc, ho, wo).astype(o_ref.dtype)


def upsample4(x_nchw: jax.Array, conv_weight: jax.Array,
              scale_factor: float = 4.0, out_dtype=None,
              batch_block: int | None = None) -> jax.Array:
    """UpSample4.forward: bilinear 4x upsample followed by 1x1 conv (no bias).

    Conv and interpolation commute exactly (1x1 conv is per-pixel, upsample is
    per-channel), so the conv is applied first on the 16x-smaller grid.
    """
    n, c, h, w = x_nchw.shape
    ho = int(math.floor(h * scale_factor))
    wo = int(math.floor(w * scale_factor))
    out_dtype = x_nchw.dtype if out_dtype is None else out_dtype

    # Trace-time numpy construction (no per-call jnp work, no kron).  The 4x
    # bilinear taps are exactly representable in bf16.
    ah = jnp.asarray(_bilinear_resize_matrix(h, ho, scale_factor), dtype=jnp.bfloat16)       # (Ho, H)
    awt = jnp.asarray(_bilinear_resize_matrix(w, wo, scale_factor).T, dtype=jnp.bfloat16)    # (W, Wo)
    wc = conv_weight.reshape(c, c).astype(jnp.float32)                                       # (Cout, Cin)

    # Fold several batch elements into one grid step (amortize per-step overhead).
    if batch_block is None:
        per_batch = (c * h * w * jnp.dtype(x_nchw.dtype).itemsize
                     + c * ho * wo * jnp.dtype(out_dtype).itemsize)
        budget = 8 * 1024 * 1024          # in+out block bytes per step (double-buffered)
        nb = max(1, min(n, budget // max(per_batch, 1)))
        while n % nb:
            nb -= 1
    else:
        nb = batch_block
    grid = (n // nb,)

    out = pl.pallas_call(
        _upsample4_kernel,
        out_shape=jax.ShapeDtypeStruct((n, c, ho, wo), out_dtype),
        grid=grid,
        in_specs=[
            pl.BlockSpec(memory_space=pltpu.MemorySpace.SMEM),        # conv weight (scalars)
            pl.BlockSpec((nb, c, h, w), lambda i: (i, 0, 0, 0)),      # x batch tile
            pl.BlockSpec((ho, h), lambda i: (0, 0)),                  # Ah
            pl.BlockSpec((w, wo), lambda i: (0, 0)),                  # Aw^T
        ],
        out_specs=pl.BlockSpec((nb, c, ho, wo), lambda i: (i, 0, 0, 0)),
        compiler_params=pltpu.CompilerParams(
            dimension_semantics=("parallel",),
            vmem_limit_bytes=32 * 1024 * 1024),
    )(wc, x_nchw, ah, awt)

    return out


def _reference(x_nchw, conv_weight, scale_factor=4.0):
    """Pure-JAX f32 reference with torch ordering (upsample H, upsample W, then conv)."""
    n, c, h, w = x_nchw.shape
    ho = int(math.floor(h * scale_factor))
    wo = int(math.floor(w * scale_factor))
    ah = jnp.asarray(_bilinear_resize_matrix(h, ho, scale_factor))
    aw = jnp.asarray(_bilinear_resize_matrix(w, wo, scale_factor))
    t = jnp.einsum('oh,nchw->ncow', ah, x_nchw.astype(jnp.float32))
    t = jnp.einsum('pw,ncow->ncop', aw, t)
    wc = conv_weight.reshape(c, c).astype(jnp.float32)
    return jnp.einsum('kc,ncop->nkop', wc, t)


if __name__ == "__main__":
    key = jax.random.PRNGKey(0)
    kx, kw = jax.random.split(key)
    N, C, H, W = 2, 4, 16, 16
    x = jax.random.normal(kx, (N, C, H, W), dtype=jnp.float32)
    # nn.Conv2d(C, C, 1, bias=False) weight: (Cout, Cin, 1, 1) -> squeezed (Cout, Cin)
    bound = 1.0 / math.sqrt(C)
    conv_w = jax.random.uniform(kw, (C, C), jnp.float32, -bound, bound)

    out = jax.block_until_ready(upsample4(x, conv_w))
    ref = jax.block_until_ready(_reference(x, conv_w))

    assert out.shape == (N, C, 4 * H, 4 * W), out.shape
    # bf16 MXU operands with f32 accumulation -> ~0.5-1% relative error vs f32 reference.
    np.testing.assert_allclose(np.asarray(out), np.asarray(ref), rtol=2e-2, atol=2e-2)
    print("KERNEL_OK")
</pallas_src>

<mosaic_0001>
module attributes {stable_mosaic.version = 11 : i64} {
  func.func @_upsample4_kernel(%arg0: i32, %arg1: memref<4x4xf32, #tpu.memory_space<smem>>, %arg2: memref<2x4x16x16xf32, #tpu.memory_space<vmem>>, %arg3: memref<64x16xbf16, #tpu.memory_space<vmem>>, %arg4: memref<16x64xbf16, #tpu.memory_space<vmem>>, %arg5: memref<2x4x64x64xf32, #tpu.memory_space<vmem>>) attributes {dimension_semantics = [#tpu.dimension_semantics<parallel>], iteration_bounds = array<i64: 1>, scalar_prefetch = 0 : i64, scratch_operands = 0 : i64, tpu.core_type = #tpu.core_type<tc>, window_params = [{transform_indices = @transform_0, window_bounds = array<i64: 4, 4>}, {transform_indices = @transform_1, window_bounds = array<i64: 2, 4, 16, 16>}, {pipeline_mode = #tpu.pipeline_mode<synchronous>, transform_indices = @transform_2, window_bounds = array<i64: 64, 16>}, {pipeline_mode = #tpu.pipeline_mode<synchronous>, transform_indices = @transform_3, window_bounds = array<i64: 16, 64>}, {transform_indices = @transform_4, window_bounds = array<i64: 2, 4, 64, 64>}]} {
    %c0 = arith.constant 0 : index
    %c0_0 = arith.constant 0 : index
    %c0_1 = arith.constant 0 : index
    %c0_2 = arith.constant 0 : index
    %0 = vector.load %arg2[%c0, %c0_0, %c0_1, %c0_2] : memref<2x4x16x16xf32, #tpu.memory_space<vmem>>, vector<2x4x16x16xf32>
    %c0_3 = arith.constant 0 : index
    %c0_4 = arith.constant 0 : index
    %1 = memref.load %arg1[%c0_3, %c0_4] : memref<4x4xf32, #tpu.memory_space<smem>>
    %2 = vector.extract_strided_slice %0 {offsets = [0, 0, 0, 0], sizes = [2, 1, 16, 16], strides = [1, 1, 1, 1]} : vector<2x4x16x16xf32> to vector<2x1x16x16xf32>
    %3 = vector.shape_cast %2 : vector<2x1x16x16xf32> to vector<2x16x16xf32>
    %4 = vector.broadcast %1 : f32 to vector<2x16x16xf32>
    %5 = arith.mulf %4, %3 : vector<2x16x16xf32>
    %c0_5 = arith.constant 0 : index
    %c1 = arith.constant 1 : index
    %6 = memref.load %arg1[%c0_5, %c1] : memref<4x4xf32, #tpu.memory_space<smem>>
    %7 = vector.extract_strided_slice %0 {offsets = [0, 1, 0, 0], sizes = [2, 1, 16, 16], strides = [1, 1, 1, 1]} : vector<2x4x16x16xf32> to vector<2x1x16x16xf32>
    %8 = vector.shape_cast %7 : vector<2x1x16x16xf32> to vector<2x16x16xf32>
    %9 = vector.broadcast %6 : f32 to vector<2x16x16xf32>
    %10 = arith.mulf %9, %8 : vector<2x16x16xf32>
    %11 = arith.addf %5, %10 : vector<2x16x16xf32>
    %c0_6 = arith.constant 0 : index
    %c2 = arith.constant 2 : index
    %12 = memref.load %arg1[%c0_6, %c2] : memref<4x4xf32, #tpu.memory_space<smem>>
    %13 = vector.extract_strided_slice %0 {offsets = [0, 2, 0, 0], sizes = [2, 1, 16, 16], strides = [1, 1, 1, 1]} : vector<2x4x16x16xf32> to vector<2x1x16x16xf32>
    %14 = vector.shape_cast %13 : vector<2x1x16x16xf32> to vector<2x16x16xf32>
    %15 = vector.broadcast %12 : f32 to vector<2x16x16xf32>
    %16 = arith.mulf %15, %14 : vector<2x16x16xf32>
    %17 = arith.addf %11, %16 : vector<2x16x16xf32>
    %c0_7 = arith.constant 0 : index
    %c3 = arith.constant 3 : index
    %18 = memref.load %arg1[%c0_7, %c3] : memref<4x4xf32, #tpu.memory_space<smem>>
    %19 = vector.extract_strided_slice %0 {offsets = [0, 3, 0, 0], sizes = [2, 1, 16, 16], strides = [1, 1, 1, 1]} : vector<2x4x16x16xf32> to vector<2x1x16x16xf32>
    %20 = vector.shape_cast %19 : vector<2x1x16x16xf32> to vector<2x16x16xf32>
    %21 = vector.broadcast %18 : f32 to vector<2x16x16xf32>
    %22 = arith.mulf %21, %20 : vector<2x16x16xf32>
    %23 = arith.addf %17, %22 : vector<2x16x16xf32>
    %c1_8 = arith.constant 1 : index
    %c0_9 = arith.constant 0 : index
    %24 = memref.load %arg1[%c1_8, %c0_9] : memref<4x4xf32, #tpu.memory_space<smem>>
    %25 = vector.extract_strided_slice %0 {offsets = [0, 0, 0, 0], sizes = [2, 1, 16, 16], strides = [1, 1, 1, 1]} : vector<2x4x16x16xf32> to vector<2x1x16x16xf32>
    %26 = vector.shape_cast %25 : vector<2x1x16x16xf32> to vector<2x16x16xf32>
    %27 = vector.broadcast %24 : f32 to vector<2x16x16xf32>
    %28 = arith.mulf %27, %26 : vector<2x16x16xf32>
    %c1_10 = arith.constant 1 : index
    %c1_11 = arith.constant 1 : index
    %29 = memref.load %arg1[%c1_10, %c1_11] : memref<4x4xf32, #tpu.memory_space<smem>>
    %30 = vector.extract_strided_slice %0 {offsets = [0, 1, 0, 0], sizes = [2, 1, 16, 16], strides = [1, 1, 1, 1]} : vector<2x4x16x16xf32> to vector<2x1x16x16xf32>
    %31 = vector.shape_cast %30 : vector<2x1x16x16xf32> to vector<2x16x16xf32>
    %32 = vector.broadcast %29 : f32 to vector<2x16x16xf32>
    %33 = arith.mulf %32, %31 : vector<2x16x16xf32>
    %34 = arith.addf %28, %33 : vector<2x16x16xf32>
    %c1_12 = arith.constant 1 : index
    %c2_13 = arith.constant 2 : index
    %35 = memref.load %arg1[%c1_12, %c2_13] : memref<4x4xf32, #tpu.memory_space<smem>>
    %36 = vector.extract_strided_slice %0 {offsets = [0, 2, 0, 0], sizes = [2, 1, 16, 16], strides = [1, 1, 1, 1]} : vector<2x4x16x16xf32> to vector<2x1x16x16xf32>
    %37 = vector.shape_cast %36 : vector<2x1x16x16xf32> to vector<2x16x16xf32>
    %38 = vector.broadcast %35 : f32 to vector<2x16x16xf32>
    %39 = arith.mulf %38, %37 : vector<2x16x16xf32>
    %40 = arith.addf %34, %39 : vector<2x16x16xf32>
    %c1_14 = arith.constant 1 : index
    %c3_15 = arith.constant 3 : index
    %41 = memref.load %arg1[%c1_14, %c3_15] : memref<4x4xf32, #tpu.memory_space<smem>>
    %42 = vector.extract_strided_slice %0 {offsets = [0, 3, 0, 0], sizes = [2, 1, 16, 16], strides = [1, 1, 1, 1]} : vector<2x4x16x16xf32> to vector<2x1x16x16xf32>
    %43 = vector.shape_cast %42 : vector<2x1x16x16xf32> to vector<2x16x16xf32>
    %44 = vector.broadcast %41 : f32 to vector<2x16x16xf32>
    %45 = arith.mulf %44, %43 : vector<2x16x16xf32>
    %46 = arith.addf %40, %45 : vector<2x16x16xf32>
    %c2_16 = arith.constant 2 : index
    %c0_17 = arith.constant 0 : index
    %47 = memref.load %arg1[%c2_16, %c0_17] : memref<4x4xf32, #tpu.memory_space<smem>>
    %48 = vector.extract_strided_slice %0 {offsets = [0, 0, 0, 0], sizes = [2, 1, 16, 16], strides = [1, 1, 1, 1]} : vector<2x4x16x16xf32> to vector<2x1x16x16xf32>
    %49 = vector.shape_cast %48 : vector<2x1x16x16xf32> to vector<2x16x16xf32>
    %50 = vector.broadcast %47 : f32 to vector<2x16x16xf32>
    %51 = arith.mulf %50, %49 : vector<2x16x16xf32>
    %c2_18 = arith.constant 2 : index
    %c1_19 = arith.constant 1 : index
    %52 = memref.load %arg1[%c2_18, %c1_19] : memref<4x4xf32, #tpu.memory_space<smem>>
    %53 = vector.extract_strided_slice %0 {offsets = [0, 1, 0, 0], sizes = [2, 1, 16, 16], strides = [1, 1, 1, 1]} : vector<2x4x16x16xf32> to vector<2x1x16x16xf32>
    %54 = vector.shape_cast %53 : vector<2x1x16x16xf32> to vector<2x16x16xf32>
    %55 = vector.broadcast %52 : f32 to vector<2x16x16xf32>
    %56 = arith.mulf %55, %54 : vector<2x16x16xf32>
    %57 = arith.addf %51, %56 : vector<2x16x16xf32>
    %c2_20 = arith.constant 2 : index
    %c2_21 = arith.constant 2 : index
    %58 = memref.load %arg1[%c2_20, %c2_21] : memref<4x4xf32, #tpu.memory_space<smem>>
    %59 = vector.extract_strided_slice %0 {offsets = [0, 2, 0, 0], sizes = [2, 1, 16, 16], strides = [1, 1, 1, 1]} : vector<2x4x16x16xf32> to vector<2x1x16x16xf32>
    %60 = vector.shape_cast %59 : vector<2x1x16x16xf32> to vector<2x16x16xf32>
    %61 = vector.broadcast %58 : f32 to vector<2x16x16xf32>
    %62 = arith.mulf %61, %60 : vector<2x16x16xf32>
    %63 = arith.addf %57, %62 : vector<2x16x16xf32>
    %c2_22 = arith.constant 2 : index
    %c3_23 = arith.constant 3 : index
    %64 = memref.load %arg1[%c2_22, %c3_23] : memref<4x4xf32, #tpu.memory_space<smem>>
    %65 = vector.extract_strided_slice %0 {offsets = [0, 3, 0, 0], sizes = [2, 1, 16, 16], strides = [1, 1, 1, 1]} : vector<2x4x16x16xf32> to vector<2x1x16x16xf32>
    %66 = vector.shape_cast %65 : vector<2x1x16x16xf32> to vector<2x16x16xf32>
    %67 = vector.broadcast %64 : f32 to vector<2x16x16xf32>
    %68 = arith.mulf %67, %66 : vector<2x16x16xf32>
    %69 = arith.addf %63, %68 : vector<2x16x16xf32>
    %c3_24 = arith.constant 3 : index
    %c0_25 = arith.constant 0 : index
    %70 = memref.load %arg1[%c3_24, %c0_25] : memref<4x4xf32, #tpu.memory_space<smem>>
    %71 = vector.extract_strided_slice %0 {offsets = [0, 0, 0, 0], sizes = [2, 1, 16, 16], strides = [1, 1, 1, 1]} : vector<2x4x16x16xf32> to vector<2x1x16x16xf32>
    %72 = vector.shape_cast %71 : vector<2x1x16x16xf32> to vector<2x16x16xf32>
    %73 = vector.broadcast %70 : f32 to vector<2x16x16xf32>
    %74 = arith.mulf %73, %72 : vector<2x16x16xf32>
    %c3_26 = arith.constant 3 : index
    %c1_27 = arith.constant 1 : index
    %75 = memref.load %arg1[%c3_26, %c1_27] : memref<4x4xf32, #tpu.memory_space<smem>>
    %76 = vector.extract_strided_slice %0 {offsets = [0, 1, 0, 0], sizes = [2, 1, 16, 16], strides = [1, 1, 1, 1]} : vector<2x4x16x16xf32> to vector<2x1x16x16xf32>
    %77 = vector.shape_cast %76 : vector<2x1x16x16xf32> to vector<2x16x16xf32>
    %78 = vector.broadcast %75 : f32 to vector<2x16x16xf32>
    %79 = arith.mulf %78, %77 : vector<2x16x16xf32>
    %80 = arith.addf %74, %79 : vector<2x16x16xf32>
    %c3_28 = arith.constant 3 : index
    %c2_29 = arith.constant 2 : index
    %81 = memref.load %arg1[%c3_28, %c2_29] : memref<4x4xf32, #tpu.memory_space<smem>>
    %82 = vector.extract_strided_slice %0 {offsets = [0, 2, 0, 0], sizes = [2, 1, 16, 16], strides = [1, 1, 1, 1]} : vector<2x4x16x16xf32> to vector<2x1x16x16xf32>
    %83 = vector.shape_cast %82 : vector<2x1x16x16xf32> to vector<2x16x16xf32>
    %84 = vector.broadcast %81 : f32 to vector<2x16x16xf32>
    %85 = arith.mulf %84, %83 : vector<2x16x16xf32>
    %86 = arith.addf %80, %85 : vector<2x16x16xf32>
    %c3_30 = arith.constant 3 : index
    %c3_31 = arith.constant 3 : index
    %87 = memref.load %arg1[%c3_30, %c3_31] : memref<4x4xf32, #tpu.memory_space<smem>>
    %88 = vector.extract_strided_slice %0 {offsets = [0, 3, 0, 0], sizes = [2, 1, 16, 16], strides = [1, 1, 1, 1]} : vector<2x4x16x16xf32> to vector<2x1x16x16xf32>
    %89 = vector.shape_cast %88 : vector<2x1x16x16xf32> to vector<2x16x16xf32>
    %90 = vector.broadcast %87 : f32 to vector<2x16x16xf32>
    %91 = arith.mulf %90, %89 : vector<2x16x16xf32>
    %92 = arith.addf %86, %91 : vector<2x16x16xf32>
    %93 = vector.shape_cast %23 : vector<2x16x16xf32> to vector<2x1x16x16xf32>
    %94 = vector.shape_cast %46 : vector<2x16x16xf32> to vector<2x1x16x16xf32>
    %95 = vector.shape_cast %69 : vector<2x16x16xf32> to vector<2x1x16x16xf32>
    %96 = vector.shape_cast %92 : vector<2x16x16xf32> to vector<2x1x16x16xf32>
    %97 = tpu.concatenate %93, %94, %95, %96 in 1 : vector<2x1x16x16xf32>, vector<2x1x16x16xf32>, vector<2x1x16x16xf32>, vector<2x1x16x16xf32> -> vector<2x4x16x16xf32>
    %98 = arith.truncf %97 : vector<2x4x16x16xf32> to vector<2x4x16x16xbf16>
    %99 = vector.shape_cast %98 : vector<2x4x16x16xbf16> to vector<8x16x16xbf16>
    %c0_32 = arith.constant 0 : index
    %c0_33 = arith.constant 0 : index
    %100 = vector.load %arg3[%c0_32, %c0_33] : memref<64x16xbf16, #tpu.memory_space<vmem>>, vector<64x16xbf16>
    %101 = vector.shape_cast %100 : vector<64x16xbf16> to vector<1x64x16xbf16>
    %102 = vector.broadcast %101 : vector<1x64x16xbf16> to vector<8x64x16xbf16>
    %cst = arith.constant dense<0.000000e+00> : vector<8x64x16xf32>
    %103 = tpu.matmul %102, %99, %cst {dimension_numbers = #tpu.dot_dimension_numbers<[2], [1], [1], [2], [0, 0, 0, 1, 1, 2], [0], [0]>} : vector<8x64x16xbf16>, vector<8x16x16xbf16>, vector<8x64x16xf32> -> vector<8x64x16xf32>
    %104 = arith.truncf %103 : vector<8x64x16xf32> to vector<8x64x16xbf16>
    %c0_34 = arith.constant 0 : index
    %c0_35 = arith.constant 0 : index
    %105 = vector.load %arg4[%c0_34, %c0_35] : memref<16x64xbf16, #tpu.memory_space<vmem>>, vector<16x64xbf16>
    %106 = vector.shape_cast %105 : vector<16x64xbf16> to vector<1x16x64xbf16>
    %107 = vector.broadcast %106 : vector<1x16x64xbf16> to vector<8x16x64xbf16>
    %cst_36 = arith.constant dense<0.000000e+00> : vector<8x64x64xf32>
    %108 = tpu.matmul %104, %107, %cst_36 {dimension_numbers = #tpu.dot_dimension_numbers<[2], [1], [1], [2], [0, 0, 0, 1, 1, 2], [0], [0]>} : vector<8x64x16xbf16>, vector<8x16x64xbf16>, vector<8x64x64xf32> -> vector<8x64x64xf32>
    %109 = vector.shape_cast %108 : vector<8x64x64xf32> to vector<2x4x64x64xf32>
    %c0_37 = arith.constant 0 : index
    %c0_38 = arith.constant 0 : index
    %c0_39 = arith.constant 0 : index
    %c0_40 = arith.constant 0 : index
    %110 = vector.load %arg5[%c0_37, %c0_38, %c0_39, %c0_40] : memref<2x4x64x64xf32, #tpu.memory_space<vmem>>, vector<2x4x64x64xf32>
    tpu.vector_store %arg5[%c0_37, %c0_38, %c0_39, %c0_40], %109 {strides = array<i32>} : memref<2x4x64x64xf32, #tpu.memory_space<vmem>>, vector<2x4x64x64xf32>,
    return
  }
  func.func @transform_0(%arg0: i32) -> (i32, i32) {
    %c0_i32 = arith.constant 0 : i32
    %c0_i32_0 = arith.constant 0 : i32
    %c0_i32_1 = arith.constant 0 : i32
    return %c0_i32, %c0_i32_0 : i32, i32
  }
  func.func @transform_1(%arg0: i32) -> (i32, i32, i32, i32) {
    %c0_i32 = arith.constant 0 : i32
    %c0_i32_0 = arith.constant 0 : i32
    %c0_i32_1 = arith.constant 0 : i32
    %c0_i32_2 = arith.constant 0 : i32
    return %arg0, %c0_i32, %c0_i32_0, %c0_i32_1 : i32, i32, i32, i32
  }
  func.func @transform_2(%arg0: i32) -> (i32, i32) {
    %c0_i32 = arith.constant 0 : i32
    %c0_i32_0 = arith.constant 0 : i32
    %c0_i32_1 = arith.constant 0 : i32
    return %c0_i32, %c0_i32_0 : i32, i32
  }
  func.func @transform_3(%arg0: i32) -> (i32, i32) {
    %c0_i32 = arith.constant 0 : i32
    %c0_i32_0 = arith.constant 0 : i32
    %c0_i32_1 = arith.constant 0 : i32
    return %c0_i32, %c0_i32_0 : i32, i32
  }
  func.func @transform_4(%arg0: i32) -> (i32, i32, i32, i32) {
    %c0_i32 = arith.constant 0 : i32
    %c0_i32_0 = arith.constant 0 : i32
    %c0_i32_1 = arith.constant 0 : i32
    %c0_i32_2 = arith.constant 0 : i32
    return %arg0, %c0_i32, %c0_i32_0, %c0_i32_1 : i32, i32, i32, i32
  }
}

</mosaic_0001>

<llo_original>
// kernel: tpu_custom_call.1
$region0: #{tpu_custom_call.1}
  #allocation0 [shape = 'u32[]', space=smem, size = 0x4, offset = 0x4, fixed_abs, tag = 'smem constant byte address 0x4 - core index']
  #allocation1 [shape = 'u32[144,128]{1,0:T(1,128)}', space=vmem, size = 0x12000, scoped, tag = 'internal scratch']
  %s0 = inlined_call_operand.vmem [shape: f32[4,4], index: 0, kind: input, shape index: {}]
  %s1 = inlined_call_operand.hbm [shape: f32[2,4,16,16], index: 1, kind: input, shape index: {}]
  %s2 = inlined_call_operand.vmem [shape: bf16[64,16], index: 2, kind: input, shape index: {}]
  %s3 = inlined_call_operand.vmem [shape: bf16[16,64], index: 3, kind: input, shape index: {}]
  %s4 = inlined_call_operand.hbm [shape: f32[2,4,64,64], index: 4, kind: output, shape index: {}]
  %s5 = sld [smem:[#allocation0]]
  $region34: #{tpu_custom_call.1} parent=0
    _
  %s7 = ssub.s32 1, %s5
  %s8 = scalar_select 0, %s7, %s5
  $region1: #{tpu_custom_call.1} parent=0
    #allocation2 [shape = 'u8[2048]{0}', space=smem, size = 0x800, scoped, tag = 'input window, operand 0, single buffered']
    #allocation3 [shape = 's32[1]{0}', space=sflag, size = 0x4, scoped, tag = 'scoped memory for tpu_custom_call.1']
    #allocation4 [shape = 's32[1]{0}', space=sflag, size = 0x4, scoped, tag = 'scoped memory for tpu_custom_call.1']
    #allocation5 [shape = 's32[1]{0}', space=sflag, size = 0x4, scoped, tag = 'scoped memory for tpu_custom_call.1']
    #allocation6 [shape = 'u8[65536]{0}', space=vmem, size = 0x10000, scoped, tag = 'input window, operand 1, single buffered']
    #allocation7 [shape = 'u8[262144]{0}', space=vmem, size = 0x40000, scoped, tag = 'output window, operand 0, single buffered']
    %9 = vsyncpa [#allocation5], 0
    %10 = vsyncpa [#allocation3], 0
    %11 = vsyncpa [#allocation4], 0
    // Predicated region
    $region2: #{tpu_custom_call.1} parent=1 // pred_check
      _
    $region3: #{tpu_custom_call.1} parent=1 // pred_check_branch
      %13 = sbr.rel (0) target = $region5
    $region4: #{tpu_custom_call.1} parent=1 // pred_region
      %s15 = ssub.s32 64, 64
      %16 = vsyncadd [#allocation5], %s15
      %s18 = sshll.u32 %s0, 4
      %s19 = int_to_ptr.vmem [resolvable:$true] %s18
      %21 = dma.vmem_to_smem %s19, 64, [#allocation2], [#allocation5]
    $region5: #{tpu_custom_call.1} parent=1 // pred_fallthru
      _
    // Predicated region
    $region6: #{tpu_custom_call.1} parent=1 // pred_check
      _
    $region7: #{tpu_custom_call.1} parent=1 // pred_check_branch
      %23 = sbr.rel (0) target = $region9
    $region8: #{tpu_custom_call.1} parent=1 // pred_region
      %s25 = ssub.s32 2048, 2048
      %26 = vsyncadd [#allocation3], %s25
      %s27 = sshll.u32 [#allocation6], 4
      %s28 = int_to_ptr.vmem [resolvable:$true] %s27
      %33 = dma.hbm_to_vmem [thread:$0]  %s1, 2048, %s28, [#allocation3], 128, 128, 8
    $region9: #{tpu_custom_call.1} parent=1 // pred_fallthru
      _
    // Predicated region
    $region10: #{tpu_custom_call.1} parent=1 // pred_check
      _
    $region11: #{tpu_custom_call.1} parent=1 // pred_check_branch
      %35 = sbr.rel (0) target = $region13
    $region12: #{tpu_custom_call.1} parent=1 // pred_region
      _
    $region13: #{tpu_custom_call.1} parent=1 // pred_fallthru
      _
    // Predicated region
    $region14: #{tpu_custom_call.1} parent=1 // pred_check
      _
    $region15: #{tpu_custom_call.1} parent=1 // pred_check_branch
      %37 = sbr.rel (0) target = $region17
    $region16: #{tpu_custom_call.1} parent=1 // pred_region
      _
    $region17: #{tpu_custom_call.1} parent=1 // pred_fallthru
      _
    // Predicated region
    $region18: #{tpu_custom_call.1} parent=1 // pred_check
      _
    $region19: #{tpu_custom_call.1} parent=1 // pred_check_branch
      %39 = sbr.rel (0) target = $region21
    $region20: #{tpu_custom_call.1} parent=1 // pred_region
      %40 = dma.done [#allocation5], 64
    $region21: #{tpu_custom_call.1} parent=1 // pred_fallthru
      _
    // Predicated region
    $region22: #{tpu_custom_call.1} parent=1 // pred_check
      _
    $region23: #{tpu_custom_call.1} parent=1 // pred_check_branch
      %42 = sbr.rel (0) target = $region25
    $region24: #{tpu_custom_call.1} parent=1 // pred_region
      %43 = dma.done [#allocation3], 2048
    $region25: #{tpu_custom_call.1} parent=1 // pred_fallthru
      _
    %44 = sfence
    %v46 = vld [vmem:[#allocation6] sm:$0xff]
    %v47 = vld [vmem:[#allocation6 + $0x8] sm:$0xff]
    %v48 = vld [vmem:[#allocation6 + $0x10] sm:$0xff]
    %v49 = vld [vmem:[#allocation6 + $0x18] sm:$0xff]
    %v50 = vld [vmem:[#allocation6 + $0x20] sm:$0xff]
    %v51 = vld [vmem:[#allocation6 + $0x28] sm:$0xff]
    %v52 = vld [vmem:[#allocation6 + $0x30] sm:$0xff]
    %v53 = vld [vmem:[#allocation6 + $0x38] sm:$0xff]
    %v54 = vld [vmem:[#allocation6 + $0x40] sm:$0xff]
    %v55 = vld [vmem:[#allocation6 + $0x48] sm:$0xff]
    %v56 = vld [vmem:[#allocation6 + $0x50] sm:$0xff]
    %v57 = vld [vmem:[#allocation6 + $0x58] sm:$0xff]
    %v58 = vld [vmem:[#allocation6 + $0x60] sm:$0xff]
    %v59 = vld [vmem:[#allocation6 + $0x68] sm:$0xff]
    %v60 = vld [vmem:[#allocation6 + $0x70] sm:$0xff]
    %v61 = vld [vmem:[#allocation6 + $0x78] sm:$0xff]
    %s62 = sld [smem:[#allocation2]]
    %v63 = vstv %s62
    %v64 = vmul.f32 %v63, %v46
    %v65 = vmul.f32 %v63, %v47
    %v66 = vmul.f32 %v63, %v54
    %v67 = vmul.f32 %v63, %v55
    %s68 = sld [smem:[#allocation2 + $0x1]]
    %v69 = vstv %s68
    %v70 = vmul.f32 %v69, %v48
    %v71 = vmul.f32 %v69, %v49
    %v72 = vmul.f32 %v69, %v56
    %v73 = vmul.f32 %v69, %v57
    %v74 = vadd.f32 %v64, %v70
    %v75 = vadd.f32 %v65, %v71
    %v76 = vadd.f32 %v66, %v72
    %v77 = vadd.f32 %v67, %v73
    %s78 = sld [smem:[#allocation2 + $0x2]]
    %v79 = vstv %s78
    %v80 = vmul.f32 %v79, %v50
    %v81 = vmul.f32 %v79, %v51
    %v82 = vmul.f32 %v79, %v58
    %v83 = vmul.f32 %v79, %v59
    %v84 = vadd.f32 %v74, %v80
    %v85 = vadd.f32 %v75, %v81
    %v86 = vadd.f32 %v76, %v82
    %v87 = vadd.f32 %v77, %v83
    %s88 = sld [smem:[#allocation2 + $0x3]]
    %v89 = vstv %s88
    %v90 = vmul.f32 %v89, %v52
    %v91 = vmul.f32 %v89, %v53
    %v92 = vmul.f32 %v89, %v60
    %v93 = vmul.f32 %v89, %v61
    %v94 = vadd.f32 %v84, %v90
    %v95 = vadd.f32 %v85, %v91
    %v96 = vadd.f32 %v86, %v92
    %v97 = vadd.f32 %v87, %v93
    %s98 = sld [smem:[#allocation2 + $0x80]]
    %v99 = vstv %s98
    %v100 = vmul.f32 %v99, %v46
    %v101 = vmul.f32 %v99, %v47
    %v102 = vmul.f32 %v99, %v54
    %v103 = vmul.f32 %v99, %v55
    %s104 = sld [smem:[#allocation2 + $0x81]]
    %v105 = vstv %s104
    %v106 = vmul.f32 %v105, %v48
    %v107 = vmul.f32 %v105, %v49
    %v108 = vmul.f32 %v105, %v56
    %v109 = vmul.f32 %v105, %v57
    %v110 = vadd.f32 %v100, %v106
    %v111 = vadd.f32 %v101, %v107
    %v112 = vadd.f32 %v102, %v108
    %v113 = vadd.f32 %v103, %v109
    %s114 = sld [smem:[#allocation2 + $0x82]]
    %v115 = vstv %s114
    %v116 = vmul.f32 %v115, %v50
    %v117 = vmul.f32 %v115, %v51
    %v118 = vmul.f32 %v115, %v58
    %v119 = vmul.f32 %v115, %v59
    %v120 = vadd.f32 %v110, %v116
    %v121 = vadd.f32 %v111, %v117
    %v122 = vadd.f32 %v112, %v118
    %v123 = vadd.f32 %v113, %v119
    %s124 = sld [smem:[#allocation2 + $0x83]]
    %v125 = vstv %s124
    %v126 = vmul.f32 %v125, %v52
    %v127 = vmul.f32 %v125, %v53
    %v128 = vmul.f32 %v125, %v60
    %v129 = vmul.f32 %v125, %v61
    %v130 = vadd.f32 %v120, %v126
    %v131 = vadd.f32 %v121, %v127
    %v132 = vadd.f32 %v122, %v128
    %v133 = vadd.f32 %v123, %v129
    %s134 = sld [smem:[#allocation2 + $0x100]]
    %v135 = vstv %s134
    %v136 = vmul.f32 %v135, %v46
    %v137 = vmul.f32 %v135, %v47
    %v138 = vmul.f32 %v135, %v54
    %v139 = vmul.f32 %v135, %v55
    %s140 = sld [smem:[#allocation2 + $0x101]]
    %v141 = vstv %s140
    %v142 = vmul.f32 %v141, %v48
    %v143 = vmul.f32 %v141, %v49
    %v144 = vmul.f32 %v141, %v56
    %v145 = vmul.f32 %v141, %v57
    %v146 = vadd.f32 %v136, %v142
    %v147 = vadd.f32 %v137, %v143
    %v148 = vadd.f32 %v138, %v144
    %v149 = vadd.f32 %v139, %v145
    %s150 = sld [smem:[#allocation2 + $0x102]]
    %v151 = vstv %s150
    %v152 = vmul.f32 %v151, %v50
    %v153 = vmul.f32 %v151, %v51
    %v154 = vmul.f32 %v151, %v58
    %v155 = vmul.f32 %v151, %v59
    %v156 = vadd.f32 %v146, %v152
    %v157 = vadd.f32 %v147, %v153
    %v158 = vadd.f32 %v148, %v154
    %v159 = vadd.f32 %v149, %v155
    %s160 = sld [smem:[#allocation2 + $0x103]]
    %v161 = vstv %s160
    %v162 = vmul.f32 %v161, %v52
    %v163 = vmul.f32 %v161, %v53
    %v164 = vmul.f32 %v161, %v60
    %v165 = vmul.f32 %v161, %v61
    %v166 = vadd.f32 %v156, %v162
    %v167 = vadd.f32 %v157, %v163
    %v168 = vadd.f32 %v158, %v164
    %v169 = vadd.f32 %v159, %v165
    %s170 = sld [smem:[#allocation2 + $0x180]]
    %v171 = vstv %s170
    %v172 = vmul.f32 %v171, %v46
    %v173 = vmul.f32 %v171, %v47
    %v174 = vmul.f32 %v171, %v54
    %v175 = vmul.f32 %v171, %v55
    %s176 = sld [smem:[#allocation2 + $0x181]]
    %v177 = vstv %s176
    %v178 = vmul.f32 %v177, %v48
    %v179 = vmul.f32 %v177, %v49
    %v180 = vmul.f32 %v177, %v56
    %v181 = vmul.f32 %v177, %v57
    %v182 = vadd.f32 %v172, %v178
    %v183 = vadd.f32 %v173, %v179
    %v184 = vadd.f32 %v174, %v180
    %v185 = vadd.f32 %v175, %v181
    %s186 = sld [smem:[#allocation2 + $0x182]]
    %v187 = vstv %s186
    %v188 = vmul.f32 %v187, %v50
    %v189 = vmul.f32 %v187, %v51
    %v190 = vmul.f32 %v187, %v58
    %v191 = vmul.f32 %v187, %v59
    %v192 = vadd.f32 %v182, %v188
    %v193 = vadd.f32 %v183, %v189
    %v194 = vadd.f32 %v184, %v190
    %v195 = vadd.f32 %v185, %v191
    %s196 = sld [smem:[#allocation2 + $0x183]]
    %v197 = vstv %s196
    %v198 = vmul.f32 %v197, %v52
    %v199 = vmul.f32 %v197, %v53
    %v200 = vmul.f32 %v197, %v60
    %v201 = vmul.f32 %v197, %v61
    %v202 = vadd.f32 %v192, %v198
    %v203 = vadd.f32 %v193, %v199
    %v204 = vadd.f32 %v194, %v200
    %v205 = vadd.f32 %v195, %v201
    %v206 = vpack.c.bf16 %v95, %v94
    %v207 = vpack.c.bf16 %v131, %v130
    %v208 = vpack.c.bf16 %v167, %v166
    %v209 = vpack.c.bf16 %v203, %v202
    %v210 = vpack.c.bf16 %v97, %v96
    %v211 = vpack.c.bf16 %v133, %v132
    %v212 = vpack.c.bf16 %v169, %v168
    %v213 = vpack.c.bf16 %v205, %v204
    %v214 = vld [vmem:[%s2] sm:$0xf]
    %v215 = vld [vmem:[%s2 + $0x4] sm:$0xf]
    %v216 = vld [vmem:[%s2 + $0x8] sm:$0xf]
    %v217 = vld [vmem:[%s2 + $0xc] sm:$0xf]
    %v218 = vld [vmem:[%s2 + $0x10] sm:$0xf]
    %v219 = vld [vmem:[%s2 + $0x14] sm:$0xf]
    %v220 = vld [vmem:[%s2 + $0x18] sm:$0xf]
    %v221 = vld [vmem:[%s2 + $0x1c] sm:$0xf]
    %v230 = vunpack.c.l.b16 %v214
    %v231 = vunpack.c.l.b16 %v215
    %v232 = vunpack.c.l.b16 %v216
    %v233 = vunpack.c.l.b16 %v217
    %v234 = vunpack.c.l.b16 %v218
    %v235 = vunpack.c.l.b16 %v219
    %v236 = vunpack.c.l.b16 %v220
    %v237 = vunpack.c.l.b16 %v221
    %v238 = vpack.c.b16 %v231, %v230
    %v239 = vpack.c.b16 %v233, %v232
    %v240 = vpack.c.b16 %v235, %v234
    %v241 = vpack.c.b16 %v237, %v236
    %vm242 = vcmask 130048
    %v244 = vsel %vm242, %v238, 0
    %v247 = vsel %vm242, %v239, 0
    %v250 = vsel %vm242, %v240, 0
    %v253 = vsel %vm242, %v241, 0
    %255 = vmatprep.subr.bf16.mxu0 0
    %256 = vmatpush1.bf16.msra.mxu0 %v206
    %257 = vmatprep.subr.bf16.mxu0 0
    %258 = vmatpush1.bf16.msra.mxu0 0
    %259 = vmatprep.subr.bf16.mxu0 0
    %260 = vmatpush1.bf16.msra.mxu0 0
    %261 = vmatprep.subr.bf16.mxu0 0
    %262 = vmatpush1.bf16.msra.mxu0 0
    %263 = vmatprep.subr.bf16.mxu0 0
    %264 = vmatpush1.bf16.msra.mxu0 0
    %265 = vmatprep.subr.bf16.mxu0 0
    %266 = vmatpush1.bf16.msra.mxu0 0
    %267 = vmatprep.subr.bf16.mxu0 0
    %268 = vmatpush1.bf16.msra.mxu0 0
    %269 = vmatprep.subr.bf16.mxu0 0
    %270 = vmatpush1.bf16.msra.mxu0 0
    %271 = vmatprep.subr.bf16.mxu0 0
    %272 = vmatpush1.bf16.msra.mxu0 0
    %273 = vmatprep.subr.bf16.mxu0 0
    %274 = vmatpush1.bf16.msra.mxu0 0
    %275 = vmatprep.subr.bf16.mxu0 0
    %276 = vmatpush1.bf16.msra.mxu0 0
    %277 = vmatprep.subr.bf16.mxu0 0
    %278 = vmatpush1.bf16.msra.mxu0 0
    %279 = vmatprep.subr.bf16.mxu0 0
    %280 = vmatpush1.bf16.msra.mxu0 0
    %281 = vmatprep.subr.bf16.mxu0 0
    %282 = vmatpush1.bf16.msra.mxu0 0
    %283 = vmatprep.subr.bf16.mxu0 0
    %284 = vmatpush1.bf16.msra.mxu0 0
    %285 = vmatprep.subr.bf16.mxu0 0
    %286 = vmatpush1.bf16.msra.mxu0 0
    %287 = vmatprep.mubr.bf16.mxu0 0
    %288 = vmatmul.mubr.bf16.gmra.mrb[0].mxu0 %v244
    %v289 = vpop.f32.mrb[0].mxu0
    %v290 = vadd.f32 0.0, %v289
    %v291 = vpop.f32.mrb[0].mxu0
    %v292 = vpop.f32.mrb[0].mxu0
    %v293 = vadd.f32 0.0, %v292
    %v294 = vpop.f32.mrb[0].mxu0
    %295 = vmatprep.mubr.bf16.mxu0 0
    %296 = vmatmul.mubr.bf16.gmra.mrb[0].mxu0 %v247
    %v297 = vpop.f32.mrb[0].mxu0
    %v298 = vadd.f32 0.0, %v297
    %v299 = vpop.f32.mrb[0].mxu0
    %v300 = vpop.f32.mrb[0].mxu0
    %v301 = vadd.f32 0.0, %v300
    %v302 = vpop.f32.mrb[0].mxu0
    %303 = vmatprep.mubr.bf16.mxu0 0
    %304 = vmatmul.mubr.bf16.gmra.mrb[0].mxu0 %v250
    %v305 = vpop.f32.mrb[0].mxu0
    %v306 = vadd.f32 0.0, %v305
    %v307 = vpop.f32.mrb[0].mxu0
    %v308 = vpop.f32.mrb[0].mxu0
    %v309 = vadd.f32 0.0, %v308
    %v310 = vpop.f32.mrb[0].mxu0
    %311 = vmatprep.mubr.bf16.mxu0 0
    %312 = vmatmul.mubr.bf16.gmra.mrb[0].mxu0 %v253
    %v313 = vpop.f32.mrb[0].mxu0
    %v314 = vadd.f32 0.0, %v313
    %v315 = vpop.f32.mrb[0].mxu0
    %v316 = vpop.f32.mrb[0].mxu0
    %v317 = vadd.f32 0.0, %v316
    %v318 = vpop.f32.mrb[0].mxu0
    %319 = vdwg.mxu0
    %320 = vmatprep.subr.bf16.mxu0 0
    %321 = vmatpush1.bf16.msra.mxu0 %v207
    %322 = vmatprep.subr.bf16.mxu0 0
    %323 = vmatpush1.bf16.msra.mxu0 0
    %324 = vmatprep.subr.bf16.mxu0 0
    %325 = vmatpush1.bf16.msra.mxu0 0
    %326 = vmatprep.subr.bf16.mxu0 0
    %327 = vmatpush1.bf16.msra.mxu0 0
    %328 = vmatprep.subr.bf16.mxu0 0
    %329 = vmatpush1.bf16.msra.mxu0 0
    %330 = vmatprep.subr.bf16.mxu0 0
    %331 = vmatpush1.bf16.msra.mxu0 0
    %332 = vmatprep.subr.bf16.mxu0 0
    %333 = vmatpush1.bf16.msra.mxu0 0
    %334 = vmatprep.subr.bf16.mxu0 0
    %335 = vmatpush1.bf16.msra.mxu0 0
    %336 = vmatprep.subr.bf16.mxu0 0
    %337 = vmatpush1.bf16.msra.mxu0 0
    %338 = vmatprep.subr.bf16.mxu0 0
    %339 = vmatpush1.bf16.msra.mxu0 0
    %340 = vmatprep.subr.bf16.mxu0 0
    %341 = vmatpush1.bf16.msra.mxu0 0
    %342 = vmatprep.subr.bf16.mxu0 0
    %343 = vmatpush1.bf16.msra.mxu0 0
    %344 = vmatprep.subr.bf16.mxu0 0
    %345 = vmatpush1.bf16.msra.mxu0 0
    %346 = vmatprep.subr.bf16.mxu0 0
    %347 = vmatpush1.bf16.msra.mxu0 0
    %348 = vmatprep.subr.bf16.mxu0 0
    %349 = vmatpush1.bf16.msra.mxu0 0
    %350 = vmatprep.subr.bf16.mxu0 0
    %351 = vmatpush1.bf16.msra.mxu0 0
    %352 = vmatprep.mubr.bf16.mxu0 0
    %353 = vmatmul.mubr.bf16.gmra.mrb[0].mxu0 %v244
    %v354 = vpop.f32.mrb[0].mxu0
    %v355 = vadd.f32 0.0, %v354
    %v356 = vpop.f32.mrb[0].mxu0
    %v357 = vpop.f32.mrb[0].mxu0
    %v358 = vadd.f32 0.0, %v357
    %v359 = vpop.f32.mrb[0].mxu0
    %360 = vmatprep.mubr.bf16.mxu0 0
    %361 = vmatmul.mubr.bf16.gmra.mrb[0].mxu0 %v247
    %v362 = vpop.f32.mrb[0].mxu0
    %v363 = vadd.f32 0.0, %v362
    %v364 = vpop.f32.mrb[0].mxu0
    %v365 = vpop.f32.mrb[0].mxu0
    %v366 = vadd.f32 0.0, %v365
    %v367 = vpop.f32.mrb[0].mxu0
    %368 = vmatprep.mubr.bf16.mxu0 0
    %369 = vmatmul.mubr.bf16.gmra.mrb[0].mxu0 %v250
    %v370 = vpop.f32.mrb[0].mxu0
    %v371 = vadd.f32 0.0, %v370
    %v372 = vpop.f32.mrb[0].mxu0
    %v373 = vpop.f32.mrb[0].mxu0
    %v374 = vadd.f32 0.0, %v373
    %v375 = vpop.f32.mrb[0].mxu0
    %376 = vmatprep.mubr.bf16.mxu0 0
    %377 = vmatmul.mubr.bf16.gmra.mrb[0].mxu0 %v253
    %v378 = vpop.f32.mrb[0].mxu0
    %v379 = vadd.f32 0.0, %v378
    %v380 = vpop.f32.mrb[0].mxu0
    %v381 = vpop.f32.mrb[0].mxu0
    %v382 = vadd.f32 0.0, %v381
    %v383 = vpop.f32.mrb[0].mxu0
    %384 = vdwg.mxu0
    %385 = vmatprep.subr.bf16.mxu0 0
    %386 = vmatpush1.bf16.msra.mxu0 %v208
    %387 = vmatprep.subr.bf16.mxu0 0
    %388 = vmatpush1.bf16.msra.mxu0 0
    %389 = vmatprep.subr.bf16.mxu0 0
    %390 = vmatpush1.bf16.msra.mxu0 0
    %391 = vmatprep.subr.bf16.mxu0 0
    %392 = vmatpush1.bf16.msra.mxu0 0
    %393 = vmatprep.subr.bf16.mxu0 0
    %394 = vmatpush1.bf16.msra.mxu0 0
    %395 = vmatprep.subr.bf16.mxu0 0
    %396 = vmatpush1.bf16.msra.mxu0 0
    %397 = vmatprep.subr.bf16.mxu0 0
    %398 = vmatpush1.bf16.msra.mxu0 0
    %399 = vmatprep.subr.bf16.mxu0 0
    %400 = vmatpush1.bf16.msra.mxu0 0
    %401 = vmatprep.subr.bf16.mxu0 0
    %402 = vmatpush1.bf16.msra.mxu0 0
    %403 = vmatprep.subr.bf16.mxu0 0
    %404 = vmatpush1.bf16.msra.mxu0 0
    %405 = vmatprep.subr.bf16.mxu0 0
    %406 = vmatpush1.bf16.msra.mxu0 0
    %407 = vmatprep.subr.bf16.mxu0 0
    %408 = vmatpush1.bf16.msra.mxu0 0
    %409 = vmatprep.subr.bf16.mxu0 0
    %410 = vmatpush1.bf16.msra.mxu0 0
    %411 = vmatprep.subr.bf16.mxu0 0
    %412 = vmatpush1.bf16.msra.mxu0 0
    %413 = vmatprep.subr.bf16.mxu0 0
    %414 = vmatpush1.bf16.msra.mxu0 0
    %415 = vmatprep.subr.bf16.mxu0 0
    %416 = vmatpush1.bf16.msra.mxu0 0
    %417 = vmatprep.mubr.bf16.mxu0 0
    %418 = vmatmul.mubr.bf16.gmra.mrb[0].mxu0 %v244
    %v419 = vpop.f32.mrb[0].mxu0
    %v420 = vadd.f32 0.0, %v419
    %v421 = vpop.f32.mrb[0].mxu0
    %v422 = vpop.f32.mrb[0].mxu0
    %v423 = vadd.f32 0.0, %v422
    %v424 = vpop.f32.mrb[0].mxu0
    %425 = vmatprep.mubr.bf16.mxu0 0
    %426 = vmatmul.mubr.bf16.gmra.mrb[0].mxu0 %v247
    %v427 = vpop.f32.mrb[0].mxu0
    %v428 = vadd.f32 0.0, %v427
    %v429 = vpop.f32.mrb[0].mxu0
    %v430 = vpop.f32.mrb[0].mxu0
    %v431 = vadd.f32 0.0, %v430
    %v432 = vpop.f32.mrb[0].mxu0
    %433 = vmatprep.mubr.bf16.mxu0 0
    %434 = vmatmul.mubr.bf16.gmra.mrb[0].mxu0 %v250
    %v435 = vpop.f32.mrb[0].mxu0
    %v436 = vadd.f32 0.0, %v435
    %v437 = vpop.f32.mrb[0].mxu0
    %v438 = vpop.f32.mrb[0].mxu0
    %v439 = vadd.f32 0.0, %v438
    %v440 = vpop.f32.mrb[0].mxu0
    %441 = vmatprep.mubr.bf16.mxu0 0
    %442 = vmatmul.mubr.bf16.gmra.mrb[0].mxu0 %v253
    %v443 = vpop.f32.mrb[0].mxu0
    %v444 = vadd.f32 0.0, %v443
    %v445 = vpop.f32.mrb[0].mxu0
    %v446 = vpop.f32.mrb[0].mxu0
    %v447 = vadd.f32 0.0, %v446
    %v448 = vpop.f32.mrb[0].mxu0
    %449 = vdwg.mxu0
    %450 = vmatprep.subr.bf16.mxu0 0
    %451 = vmatpush1.bf16.msra.mxu0 %v209
    %452 = vmatprep.subr.bf16.mxu0 0
    %453 = vmatpush1.bf16.msra.mxu0 0
    %454 = vmatprep.subr.bf16.mxu0 0
    %455 = vmatpush1.bf16.msra.mxu0 0
    %456 = vmatprep.subr.bf16.mxu0 0
    %457 = vmatpush1.bf16.msra.mxu0 0
    %458 = vmatprep.subr.bf16.mxu0 0
    %459 = vmatpush1.bf16.msra.mxu0 0
    %460 = vmatprep.subr.bf16.mxu0 0
    %461 = vmatpush1.bf16.msra.mxu0 0
    %462 = vmatprep.subr.bf16.mxu0 0
    %463 = vmatpush1.bf16.msra.mxu0 0
    %464 = vmatprep.subr.bf16.mxu0 0
    %465 = vmatpush1.bf16.msra.mxu0 0
    %466 = vmatprep.subr.bf16.mxu0 0
    %467 = vmatpush1.bf16.msra.mxu0 0
    %468 = vmatprep.subr.bf16.mxu0 0
    %469 = vmatpush1.bf16.msra.mxu0 0
    %470 = vmatprep.subr.bf16.mxu0 0
    %471 = vmatpush1.bf16.msra.mxu0 0
    %472 = vmatprep.subr.bf16.mxu0 0
    %473 = vmatpush1.bf16.msra.mxu0 0
    %474 = vmatprep.subr.bf16.mxu0 0
    %475 = vmatpush1.bf16.msra.mxu0 0
    %476 = vmatprep.subr.bf16.mxu0 0
    %477 = vmatpush1.bf16.msra.mxu0 0
    %478 = vmatprep.subr.bf16.mxu0 0
    %479 = vmatpush1.bf16.msra.mxu0 0
    %480 = vmatprep.subr.bf16.mxu0 0
    %481 = vmatpush1.bf16.msra.mxu0 0
    %482 = vmatprep.mubr.bf16.mxu0 0
    %483 = vmatmul.mubr.bf16.gmra.mrb[0].mxu0 %v244
    %v484 = vpop.f32.mrb[0].mxu0
    %v485 = vadd.f32 0.0, %v484
    %v486 = vpop.f32.mrb[0].mxu0
    %v487 = vpop.f32.mrb[0].mxu0
    %v488 = vadd.f32 0.0, %v487
    %v489 = vpop.f32.mrb[0].mxu0
    %490 = vmatprep.mubr.bf16.mxu0 0
    %491 = vmatmul.mubr.bf16.gmra.mrb[0].mxu0 %v247
    %v492 = vpop.f32.mrb[0].mxu0
    %v493 = vadd.f32 0.0, %v492
    %v494 = vpop.f32.mrb[0].mxu0
    %v495 = vpop.f32.mrb[0].mxu0
    %v496 = vadd.f32 0.0, %v495
    %v497 = vpop.f32.mrb[0].mxu0
    %498 = vmatprep.mubr.bf16.mxu0 0
    %499 = vmatmul.mubr.bf16.gmra.mrb[0].mxu0 %v250
    %v500 = vpop.f32.mrb[0].mxu0
    %v501 = vadd.f32 0.0, %v500
    %v502 = vpop.f32.mrb[0].mxu0
    %v503 = vpop.f32.mrb[0].mxu0
    %v504 = vadd.f32 0.0, %v503
    %v505 = vpop.f32.mrb[0].mxu0
    %506 = vmatprep.mubr.bf16.mxu0 0
    %507 = vmatmul.mubr.bf16.gmra.mrb[0].mxu0 %v253
    %v508 = vpop.f32.mrb[0].mxu0
    %v509 = vadd.f32 0.0, %v508
    %v510 = vpop.f32.mrb[0].mxu0
    %v511 = vpop.f32.mrb[0].mxu0
    %v512 = vadd.f32 0.0, %v511
    %v513 = vpop.f32.mrb[0].mxu0
    %514 = vdwg.mxu0
    %515 = vmatprep.subr.bf16.mxu0 0
    %516 = vmatpush1.bf16.msra.mxu0 %v210
    %517 = vmatprep.subr.bf16.mxu0 0
    %518 = vmatpush1.bf16.msra.mxu0 0
    %519 = vmatprep.subr.bf16.mxu0 0
    %520 = vmatpush1.bf16.msra.mxu0 0
    %521 = vmatprep.subr.bf16.mxu0 0
    %522 = vmatpush1.bf16.msra.mxu0 0
    %523 = vmatprep.subr.bf16.mxu0 0
    %524 = vmatpush1.bf16.msra.mxu0 0
    %525 = vmatprep.subr.bf16.mxu0 0
    %526 = vmatpush1.bf16.msra.mxu0 0
    %527 = vmatprep.subr.bf16.mxu0 0
    %528 = vmatpush1.bf16.msra.mxu0 0
    %529 = vmatprep.subr.bf16.mxu0 0
    %530 = vmatpush1.bf16.msra.mxu0 0
    %531 = vmatprep.subr.bf16.mxu0 0
    %532 = vmatpush1.bf16.msra.mxu0 0
    %533 = vmatprep.subr.bf16.mxu0 0
    %534 = vmatpush1.bf16.msra.mxu0 0
    %535 = vmatprep.subr.bf16.mxu0 0
    %536 = vmatpush1.bf16.msra.mxu0 0
    %537 = vmatprep.subr.bf16.mxu0 0
    %538 = vmatpush1.bf16.msra.mxu0 0
    %539 = vmatprep.subr.bf16.mxu0 0
    %540 = vmatpush1.bf16.msra.mxu0 0
    %541 = vmatprep.subr.bf16.mxu0 0
    %542 = vmatpush1.bf16.msra.mxu0 0
    %543 = vmatprep.subr.bf16.mxu0 0
    %544 = vmatpush1.bf16.msra.mxu0 0
    %545 = vmatprep.subr.bf16.mxu0 0
    %546 = vmatpush1.bf16.msra.mxu0 0
    %547 = vmatprep.mubr.bf16.mxu0 0
    %548 = vmatmul.mubr.bf16.gmra.mrb[0].mxu0 %v244
    %v549 = vpop.f32.mrb[0].mxu0
    %v550 = vadd.f32 0.0, %v549
    %v551 = vpop.f32.mrb[0].mxu0
    %v552 = vpop.f32.mrb[0].mxu0
    %v553 = vadd.f32 0.0, %v552
    %v554 = vpop.f32.mrb[0].mxu0
    %555 = vmatprep.mubr.bf16.mxu0 0
    %556 = vmatmul.mubr.bf16.gmra.mrb[0].mxu0 %v247
    %v557 = vpop.f32.mrb[0].mxu0
    %v558 = vadd.f32 0.0, %v557
    %v559 = vpop.f32.mrb[0].mxu0
    %v560 = vpop.f32.mrb[0].mxu0
    %v561 = vadd.f32 0.0, %v560
    %v562 = vpop.f32.mrb[0].mxu0
    %563 = vmatprep.mubr.bf16.mxu0 0
    %564 = vmatmul.mubr.bf16.gmra.mrb[0].mxu0 %v250
    %v565 = vpop.f32.mrb[0].mxu0
    %v566 = vadd.f32 0.0, %v565
    %v567 = vpop.f32.mrb[0].mxu0
    %v568 = vpop.f32.mrb[0].mxu0
    %v569 = vadd.f32 0.0, %v568
    %v570 = vpop.f32.mrb[0].mxu0
    %571 = vmatprep.mubr.bf16.mxu0 0
    %572 = vmatmul.mubr.bf16.gmra.mrb[0].mxu0 %v253
    %v573 = vpop.f32.mrb[0].mxu0
    %v574 = vadd.f32 0.0, %v573
    %v575 = vpop.f32.mrb[0].mxu0
    %v576 = vpop.f32.mrb[0].mxu0
    %v577 = vadd.f32 0.0, %v576
    %v578 = vpop.f32.mrb[0].mxu0
    %579 = vdwg.mxu0
    %580 = vmatprep.subr.bf16.mxu0 0
    %581 = vmatpush1.bf16.msra.mxu0 %v211
    %582 = vmatprep.subr.bf16.mxu0 0
    %583 = vmatpush1.bf16.msra.mxu0 0
    %584 = vmatprep.subr.bf16.mxu0 0
    %585 = vmatpush1.bf16.msra.mxu0 0
    %586 = vmatprep.subr.bf16.mxu0 0
    %587 = vmatpush1.bf16.msra.mxu0 0
    %588 = vmatprep.subr.bf16.mxu0 0
    %589 = vmatpush1.bf16.msra.mxu0 0
    %590 = vmatprep.subr.bf16.mxu0 0
    %591 = vmatpush1.bf16.msra.mxu0 0
    %592 = vmatprep.subr.bf16.mxu0 0
    %593 = vmatpush1.bf16.msra.mxu0 0
    %594 = vmatprep.subr.bf16.mxu0 0
    %595 = vmatpush1.bf16.msra.mxu0 0
    %596 = vmatprep.subr.bf16.mxu0 0
    %597 = vmatpush1.bf16.msra.mxu0 0
    %598 = vmatprep.subr.bf16.mxu0 0
    %599 = vmatpush1.bf16.msra.mxu0 0
    %600 = vmatprep.subr.bf16.mxu0 0
    %601 = vmatpush1.bf16.msra.mxu0 0
    %602 = vmatprep.subr.bf16.mxu0 0
    %603 = vmatpush1.bf16.msra.mxu0 0
    %604 = vmatprep.subr.bf16.mxu0 0
    %605 = vmatpush1.bf16.msra.mxu0 0
    %606 = vmatprep.subr.bf16.mxu0 0
    %607 = vmatpush1.bf16.msra.mxu0 0
    %608 = vmatprep.subr.bf16.mxu0 0
    %609 = vmatpush1.bf16.msra.mxu0 0
    %610 = vmatprep.subr.bf16.mxu0 0
    %611 = vmatpush1.bf16.msra.mxu0 0
    %612 = vmatprep.mubr.bf16.mxu0 0
    %613 = vmatmul.mubr.bf16.gmra.mrb[0].mxu0 %v244
    %v614 = vpop.f32.mrb[0].mxu0
    %v615 = vadd.f32 0.0, %v614
    %v616 = vpop.f32.mrb[0].mxu0
    %v617 = vpop.f32.mrb[0].mxu0
    %v618 = vadd.f32 0.0, %v617
    %v619 = vpop.f32.mrb[0].mxu0
    %620 = vmatprep.mubr.bf16.mxu0 0
    %621 = vmatmul.mubr.bf16.gmra.mrb[0].mxu0 %v247
    %v622 = vpop.f32.mrb[0].mxu0
    %v623 = vadd.f32 0.0, %v622
    %v624 = vpop.f32.mrb[0].mxu0
    %v625 = vpop.f32.mrb[0].mxu0
    %v626 = vadd.f32 0.0, %v625
    %v627 = vpop.f32.mrb[0].mxu0
    %628 = vmatprep.mubr.bf16.mxu0 0
    %629 = vmatmul.mubr.bf16.gmra.mrb[0].mxu0 %v250
    %v630 = vpop.f32.mrb[0].mxu0
    %v631 = vadd.f32 0.0, %v630
    %v632 = vpop.f32.mrb[0].mxu0
    %v633 = vpop.f32.mrb[0].mxu0
    %v634 = vadd.f32 0.0, %v633
    %v635 = vpop.f32.mrb[0].mxu0
    %636 = vmatprep.mubr.bf16.mxu0 0
    %637 = vmatmul.mubr.bf16.gmra.mrb[0].mxu0 %v253
    %v638 = vpop.f32.mrb[0].mxu0
    %v639 = vadd.f32 0.0, %v638
    %v640 = vpop.f32.mrb[0].mxu0
    %v641 = vpop.f32.mrb[0].mxu0
    %v642 = vadd.f32 0.0, %v641
    %v643 = vpop.f32.mrb[0].mxu0
    %644 = vdwg.mxu0
    %645 = vmatprep.subr.bf16.mxu0 0
    %646 = vmatpush1.bf16.msra.mxu0 %v212
    %647 = vmatprep.subr.bf16.mxu0 0
    %648 = vmatpush1.bf16.msra.mxu0 0
    %649 = vmatprep.subr.bf16.mxu0 0
    %650 = vmatpush1.bf16.msra.mxu0 0
    %651 = vmatprep.subr.bf16.mxu0 0
    %652 = vmatpush1.bf16.msra.mxu0 0
    %653 = vmatprep.subr.bf16.mxu0 0
    %654 = vmatpush1.bf16.msra.mxu0 0
    %655 = vmatprep.subr.bf16.mxu0 0
    %656 = vmatpush1.bf16.msra.mxu0 0
    %657 = vmatprep.subr.bf16.mxu0 0
    %658 = vmatpush1.bf16.msra.mxu0 0
    %659 = vmatprep.subr.bf16.mxu0 0
    %660 = vmatpush1.bf16.msra.mxu0 0
    %661 = vmatprep.subr.bf16.mxu0 0
    %662 = vmatpush1.bf16.msra.mxu0 0
    %663 = vmatprep.subr.bf16.mxu0 0
    %664 = vmatpush1.bf16.msra.mxu0 0
    %665 = vmatprep.subr.bf16.mxu0 0
    %666 = vmatpush1.bf16.msra.mxu0 0
    %667 = vmatprep.subr.bf16.mxu0 0
    %668 = vmatpush1.bf16.msra.mxu0 0
    %669 = vmatprep.subr.bf16.mxu0 0
    %670 = vmatpush1.bf16.msra.mxu0 0
    %671 = vmatprep.subr.bf16.mxu0 0
    %672 = vmatpush1.bf16.msra.mxu0 0
    %673 = vmatprep.subr.bf16.mxu0 0
    %674 = vmatpush1.bf16.msra.mxu0 0
    %675 = vmatprep.subr.bf16.mxu0 0
    %676 = vmatpush1.bf16.msra.mxu0 0
    %677 = vmatprep.mubr.bf16.mxu0 0
    %678 = vmatmul.mubr.bf16.gmra.mrb[0].mxu0 %v244
    %v679 = vpop.f32.mrb[0].mxu0
    %v680 = vadd.f32 0.0, %v679
    %v681 = vpop.f32.mrb[0].mxu0
    %v682 = vpop.f32.mrb[0].mxu0
    %v683 = vadd.f32 0.0, %v682
    %v684 = vpop.f32.mrb[0].mxu0
    %685 = vmatprep.mubr.bf16.mxu0 0
    %686 = vmatmul.mubr.bf16.gmra.mrb[0].mxu0 %v247
    %v687 = vpop.f32.mrb[0].mxu0
    %v688 = vadd.f32 0.0, %v687
    %v689 = vpop.f32.mrb[0].mxu0
    %v690 = vpop.f32.mrb[0].mxu0
    %v691 = vadd.f32 0.0, %v690
    %v692 = vpop.f32.mrb[0].mxu0
    %693 = vmatprep.mubr.bf16.mxu0 0
    %694 = vmatmul.mubr.bf16.gmra.mrb[0].mxu0 %v250
    %v695 = vpop.f32.mrb[0].mxu0
    %v696 = vadd.f32 0.0, %v695
    %v697 = vpop.f32.mrb[0].mxu0
    %v698 = vpop.f32.mrb[0].mxu0
    %v699 = vadd.f32 0.0, %v698
    %v700 = vpop.f32.mrb[0].mxu0
    %701 = vmatprep.mubr.bf16.mxu0 0
    %702 = vmatmul.mubr.bf16.gmra.mrb[0].mxu0 %v253
    %v703 = vpop.f32.mrb[0].mxu0
    %v704 = vadd.f32 0.0, %v703
    %v705 = vpop.f32.mrb[0].mxu0
    %v706 = vpop.f32.mrb[0].mxu0
    %v707 = vadd.f32 0.0, %v706
    %v708 = vpop.f32.mrb[0].mxu0
    %709 = vdwg.mxu0
    %710 = vmatprep.subr.bf16.mxu0 0
    %711 = vmatpush1.bf16.msra.mxu0 %v213
    %712 = vmatprep.subr.bf16.mxu0 0
    %713 = vmatpush1.bf16.msra.mxu0 0
    %714 = vmatprep.subr.bf16.mxu0 0
    %715 = vmatpush1.bf16.msra.mxu0 0
    %716 = vmatprep.subr.bf16.mxu0 0
    %717 = vmatpush1.bf16.msra.mxu0 0
    %718 = vmatprep.subr.bf16.mxu0 0
    %719 = vmatpush1.bf16.msra.mxu0 0
    %720 = vmatprep.subr.bf16.mxu0 0
    %721 = vmatpush1.bf16.msra.mxu0 0
    %722 = vmatprep.subr.bf16.mxu0 0
    %723 = vmatpush1.bf16.msra.mxu0 0
    %724 = vmatprep.subr.bf16.mxu0 0
    %725 = vmatpush1.bf16.msra.mxu0 0
    %726 = vmatprep.subr.bf16.mxu0 0
    %727 = vmatpush1.bf16.msra.mxu0 0
    %728 = vmatprep.subr.bf16.mxu0 0
    %729 = vmatpush1.bf16.msra.mxu0 0
    %730 = vmatprep.subr.bf16.mxu0 0
    %731 = vmatpush1.bf16.msra.mxu0 0
    %732 = vmatprep.subr.bf16.mxu0 0
    %733 = vmatpush1.bf16.msra.mxu0 0
    %734 = vmatprep.subr.bf16.mxu0 0
    %735 = vmatpush1.bf16.msra.mxu0 0
    %736 = vmatprep.subr.bf16.mxu0 0
    %737 = vmatpush1.bf16.msra.mxu0 0
    %738 = vmatprep.subr.bf16.mxu0 0
    %739 = vmatpush1.bf16.msra.mxu0 0
    %740 = vmatprep.subr.bf16.mxu0 0
    %741 = vmatpush1.bf16.msra.mxu0 0
    %742 = vmatprep.mubr.bf16.mxu0 0
    %743 = vmatmul.mubr.bf16.gmra.mrb[0].mxu0 %v244
    %v744 = vpop.f32.mrb[0].mxu0
    %v745 = vadd.f32 0.0, %v744
    %v746 = vpop.f32.mrb[0].mxu0
    %v747 = vpop.f32.mrb[0].mxu0
    %v748 = vadd.f32 0.0, %v747
    %v749 = vpop.f32.mrb[0].mxu0
    %750 = vmatprep.mubr.bf16.mxu0 0
    %751 = vmatmul.mubr.bf16.gmra.mrb[0].mxu0 %v247
    %v752 = vpop.f32.mrb[0].mxu0
    %v753 = vadd.f32 0.0, %v752
    %v754 = vpop.f32.mrb[0].mxu0
    %v755 = vpop.f32.mrb[0].mxu0
    %v756 = vadd.f32 0.0, %v755
    %v757 = vpop.f32.mrb[0].mxu0
    %758 = vmatprep.mubr.bf16.mxu0 0
    %759 = vmatmul.mubr.bf16.gmra.mrb[0].mxu0 %v250
    %v760 = vpop.f32.mrb[0].mxu0
    %v761 = vadd.f32 0.0, %v760
    %v762 = vpop.f32.mrb[0].mxu0
    %v763 = vpop.f32.mrb[0].mxu0
    %v764 = vadd.f32 0.0, %v763
    %v765 = vpop.f32.mrb[0].mxu0
    %766 = vmatprep.mubr.bf16.mxu0 0
    %767 = vmatmul.mubr.bf16.gmra.mrb[0].mxu0 %v253
    %v768 = vpop.f32.mrb[0].mxu0
    %v769 = vadd.f32 0.0, %v768
    %v770 = vpop.f32.mrb[0].mxu0
    %v771 = vpop.f32.mrb[0].mxu0
    %v772 = vadd.f32 0.0, %v771
    %v773 = vpop.f32.mrb[0].mxu0
    %774 = vdwg.mxu0
    %v775 = vpack.c.bf16 %v293, %v290
    %v776 = vpack.c.bf16 %v301, %v298
    %v777 = vpack.c.bf16 %v309, %v306
    %v778 = vpack.c.bf16 %v317, %v314
    %v779 = vpack.c.bf16 %v358, %v355
    %v780 = vpack.c.bf16 %v366, %v363
    %v781 = vpack.c.bf16 %v374, %v371
    %v782 = vpack.c.bf16 %v382, %v379
    %v783 = vpack.c.bf16 %v423, %v420
    %v784 = vpack.c.bf16 %v431, %v428
    %v785 = vpack.c.bf16 %v439, %v436
    %v786 = vpack.c.bf16 %v447, %v444
    %v787 = vpack.c.bf16 %v488, %v485
    %v788 = vpack.c.bf16 %v496, %v493
    %v789 = vpack.c.bf16 %v504, %v501
    %v790 = vpack.c.bf16 %v512, %v509
    %v791 = vpack.c.bf16 %v553, %v550
    %v792 = vpack.c.bf16 %v561, %v558
    %v793 = vpack.c.bf16 %v569, %v566
    %v794 = vpack.c.bf16 %v577, %v574
    %v795 = vpack.c.bf16 %v618, %v615
    %v796 = vpack.c.bf16 %v626, %v623
    %v797 = vpack.c.bf16 %v634, %v631
    %v798 = vpack.c.bf16 %v642, %v639
    %v799 = vpack.c.bf16 %v683, %v680
    %v800 = vpack.c.bf16 %v691, %v688
    %v801 = vpack.c.bf16 %v699, %v696
    %v802 = vpack.c.bf16 %v707, %v704
    %v803 = vpack.c.bf16 %v748, %v745
    %v804 = vpack.c.bf16 %v756, %v753
    %v805 = vpack.c.bf16 %v764, %v761
    %v806 = vpack.c.bf16 %v772, %v769
    %v807 = vld [vmem:[%s3] sm:$0xf]
    %v808 = vld [vmem:[%s3 + $0x4] sm:$0xf]
    %v811 = vunpack.c.l.b16 %v807
    %v812 = vunpack.c.l.b16 %v808
    %v813 = vpack.c.b16 %v812, %v811
    %v816 = vsel %vm242, %v775, 0
    %v819 = vsel %vm242, %v776, 0
    %v822 = vsel %vm242, %v777, 0
    %v825 = vsel %vm242, %v778, 0
    %827 = vmatprep.subr.bf16.mxu0 0
    %828 = vmatpush1.bf16.msra.mxu0 %v813
    %829 = vmatprep.subr.bf16.mxu0 0
    %830 = vmatpush1.bf16.msra.mxu0 0
    %831 = vmatprep.subr.bf16.mxu0 0
    %832 = vmatpush1.bf16.msra.mxu0 0
    %833 = vmatprep.subr.bf16.mxu0 0
    %834 = vmatpush1.bf16.msra.mxu0 0
    %835 = vmatprep.subr.bf16.mxu0 0
    %836 = vmatpush1.bf16.msra.mxu0 0
    %837 = vmatprep.subr.bf16.mxu0 0
    %838 = vmatpush1.bf16.msra.mxu0 0
    %839 = vmatprep.subr.bf16.mxu0 0
    %840 = vmatpush1.bf16.msra.mxu0 0
    %841 = vmatprep.subr.bf16.mxu0 0
    %842 = vmatpush1.bf16.msra.mxu0 0
    %843 = vmatprep.subr.bf16.mxu0 0
    %844 = vmatpush1.bf16.msra.mxu0 0
    %845 = vmatprep.subr.bf16.mxu0 0
    %846 = vmatpush1.bf16.msra.mxu0 0
    %847 = vmatprep.subr.bf16.mxu0 0
    %848 = vmatpush1.bf16.msra.mxu0 0
    %849 = vmatprep.subr.bf16.mxu0 0
    %850 = vmatpush1.bf16.msra.mxu0 0
    %851 = vmatprep.subr.bf16.mxu0 0
    %852 = vmatpush1.bf16.msra.mxu0 0
    %853 = vmatprep.subr.bf16.mxu0 0
    %854 = vmatpush1.bf16.msra.mxu0 0
    %855 = vmatprep.subr.bf16.mxu0 0
    %856 = vmatpush1.bf16.msra.mxu0 0
    %857 = vmatprep.subr.bf16.mxu0 0
    %858 = vmatpush1.bf16.msra.mxu0 0
    %859 = vmatprep.mubr.bf16.mxu0 0
    %860 = vmatmul.mubr.bf16.gmra.mrb[0].mxu0 %v816
    %v861 = vpop.f32.mrb[0].mxu0
    %v862 = vadd.f32 0.0, %v861
    %v863 = vpop.f32.mrb[0].mxu0
    %v864 = vpop.f32.mrb[0].mxu0
    %v865 = vadd.f32 0.0, %v864
    %v866 = vpop.f32.mrb[0].mxu0
    %867 = vmatprep.mubr.bf16.mxu0 0
    %868 = vmatmul.mubr.bf16.gmra.mrb[0].mxu0 %v819
    %v869 = vpop.f32.mrb[0].mxu0
    %v870 = vadd.f32 0.0, %v869
    %v871 = vpop.f32.mrb[0].mxu0
    %v872 = vpop.f32.mrb[0].mxu0
    %v873 = vadd.f32 0.0, %v872
    %v874 = vpop.f32.mrb[0].mxu0
    %875 = vmatprep.mubr.bf16.mxu0 0
    %876 = vmatmul.mubr.bf16.gmra.mrb[0].mxu0 %v822
    %v877 = vpop.f32.mrb[0].mxu0
    %v878 = vadd.f32 0.0, %v877
    %v879 = vpop.f32.mrb[0].mxu0
    %v880 = vpop.f32.mrb[0].mxu0
    %v881 = vadd.f32 0.0, %v880
    %v882 = vpop.f32.mrb[0].mxu0
    %883 = vmatprep.mubr.bf16.mxu0 0
    %884 = vmatmul.mubr.bf16.gmra.mrb[0].mxu0 %v825
    %v885 = vpop.f32.mrb[0].mxu0
    %v886 = vadd.f32 0.0, %v885
    %v887 = vpop.f32.mrb[0].mxu0
    %v888 = vpop.f32.mrb[0].mxu0
    %v889 = vadd.f32 0.0, %v888
    %v890 = vpop.f32.mrb[0].mxu0
    %891 = vdwg.mxu0
    %v893 = vsel %vm242, %v779, 0
    %v896 = vsel %vm242, %v780, 0
    %v899 = vsel %vm242, %v781, 0
    %v902 = vsel %vm242, %v782, 0
    %904 = vmatprep.subr.bf16.mxu0 0
    %905 = vmatpush1.bf16.msra.mxu0 %v813
    %906 = vmatprep.subr.bf16.mxu0 0
    %907 = vmatpush1.bf16.msra.mxu0 0
    %908 = vmatprep.subr.bf16.mxu0 0
    %909 = vmatpush1.bf16.msra.mxu0 0
    %910 = vmatprep.subr.bf16.mxu0 0
    %911 = vmatpush1.bf16.msra.mxu0 0
    %912 = vmatprep.subr.bf16.mxu0 0
    %913 = vmatpush1.bf16.msra.mxu0 0
    %914 = vmatprep.subr.bf16.mxu0 0
    %915 = vmatpush1.bf16.msra.mxu0 0
    %916 = vmatprep.subr.bf16.mxu0 0
    %917 = vmatpush1.bf16.msra.mxu0 0
    %918 = vmatprep.subr.bf16.mxu0 0
    %919 = vmatpush1.bf16.msra.mxu0 0
    %920 = vmatprep.subr.bf16.mxu0 0
    %921 = vmatpush1.bf16.msra.mxu0 0
    %922 = vmatprep.subr.bf16.mxu0 0
    %923 = vmatpush1.bf16.msra.mxu0 0
    %924 = vmatprep.subr.bf16.mxu0 0
    %925 = vmatpush1.bf16.msra.mxu0 0
    %926 = vmatprep.subr.bf16.mxu0 0
    %927 = vmatpush1.bf16.msra.mxu0 0
    %928 = vmatprep.subr.bf16.mxu0 0
    %929 = vmatpush1.bf16.msra.mxu0 0
    %930 = vmatprep.subr.bf16.mxu0 0
    %931 = vmatpush1.bf16.msra.mxu0 0
    %932 = vmatprep.subr.bf16.mxu0 0
    %933 = vmatpush1.bf16.msra.mxu0 0
    %934 = vmatprep.subr.bf16.mxu0 0
    %935 = vmatpush1.bf16.msra.mxu0 0
    %936 = vmatprep.mubr.bf16.mxu0 0
    %937 = vmatmul.mubr.bf16.gmra.mrb[0].mxu0 %v893
    %v938 = vpop.f32.mrb[0].mxu0
    %v939 = vadd.f32 0.0, %v938
    %v940 = vpop.f32.mrb[0].mxu0
    %v941 = vpop.f32.mrb[0].mxu0
    %v942 = vadd.f32 0.0, %v941
    %v943 = vpop.f32.mrb[0].mxu0
    %944 = vmatprep.mubr.bf16.mxu0 0
    %945 = vmatmul.mubr.bf16.gmra.mrb[0].mxu0 %v896
    %v946 = vpop.f32.mrb[0].mxu0
    %v947 = vadd.f32 0.0, %v946
    %v948 = vpop.f32.mrb[0].mxu0
    %v949 = vpop.f32.mrb[0].mxu0
    %v950 = vadd.f32 0.0, %v949
    %v951 = vpop.f32.mrb[0].mxu0
    %952 = vmatprep.mubr.bf16.mxu0 0
    %953 = vmatmul.mubr.bf16.gmra.mrb[0].mxu0 %v899
    %v954 = vpop.f32.mrb[0].mxu0
    %v955 = vadd.f32 0.0, %v954
    %v956 = vpop.f32.mrb[0].mxu0
    %v957 = vpop.f32.mrb[0].mxu0
    %v958 = vadd.f32 0.0, %v957
    %v959 = vpop.f32.mrb[0].mxu0
    %960 = vmatprep.mubr.bf16.mxu0 0
    %961 = vmatmul.mubr.bf16.gmra.mrb[0].mxu0 %v902
    %v962 = vpop.f32.mrb[0].mxu0
    %v963 = vadd.f32 0.0, %v962
    %v964 = vpop.f32.mrb[0].mxu0
    %v965 = vpop.f32.mrb[0].mxu0
    %v966 = vadd.f32 0.0, %v965
    %v967 = vpop.f32.mrb[0].mxu0
    %968 = vdwg.mxu0
    %v970 = vsel %vm242, %v783, 0
    %v973 = vsel %vm242, %v784, 0
    %v976 = vsel %vm242, %v785, 0
    %v979 = vsel %vm242, %v786, 0
    %981 = vmatprep.subr.bf16.mxu0 0
    %982 = vmatpush1.bf16.msra.mxu0 %v813
    %983 = vmatprep.subr.bf16.mxu0 0
    %984 = vmatpush1.bf16.msra.mxu0 0
    %985 = vmatprep.subr.bf16.mxu0 0
    %986 = vmatpush1.bf16.msra.mxu0 0
    %987 = vmatprep.subr.bf16.mxu0 0
    %988 = vmatpush1.bf16.msra.mxu0 0
    %989 = vmatprep.subr.bf16.mxu0 0
    %990 = vmatpush1.bf16.msra.mxu0 0
    %991 = vmatprep.subr.bf16.mxu0 0
    %992 = vmatpush1.bf16.msra.mxu0 0
    %993 = vmatprep.subr.bf16.mxu0 0
    %994 = vmatpush1.bf16.msra.mxu0 0
    %995 = vmatprep.subr.bf16.mxu0 0
    %996 = vmatpush1.bf16.msra.mxu0 0
    %997 = vmatprep.subr.bf16.mxu0 0
    %998 = vmatpush1.bf16.msra.mxu0 0
    %999 = vmatprep.subr.bf16.mxu0 0
    %1000 = vmatpush1.bf16.msra.mxu0 0
    %1001 = vmatprep.subr.bf16.mxu0 0
    %1002 = vmatpush1.bf16.msra.mxu0 0
    %1003 = vmatprep.subr.bf16.mxu0 0
    %1004 = vmatpush1.bf16.msra.mxu0 0
    %1005 = vmatprep.subr.bf16.mxu0 0
    %1006 = vmatpush1.bf16.msra.mxu0 0
    %1007 = vmatprep.subr.bf16.mxu0 0
    %1008 = vmatpush1.bf16.msra.mxu0 0
    %1009 = vmatprep.subr.bf16.mxu0 0
    %1010 = vmatpush1.bf16.msra.mxu0 0
    %1011 = vmatprep.subr.bf16.mxu0 0
    %1012 = vmatpush1.bf16.msra.mxu0 0
    %1013 = vmatprep.mubr.bf16.mxu0 0
    %1014 = vmatmul.mubr.bf16.gmra.mrb[0].mxu0 %v970
    %v1015 = vpop.f32.mrb[0].mxu0
    %v1016 = vadd.f32 0.0, %v1015
    %v1017 = vpop.f32.mrb[0].mxu0
    %v1018 = vpop.f32.mrb[0].mxu0
    %v1019 = vadd.f32 0.0, %v1018
    %v1020 = vpop.f32.mrb[0].mxu0
    %1021 = vmatprep.mubr.bf16.mxu0 0
    %1022 = vmatmul.mubr.bf16.gmra.mrb[0].mxu0 %v973
    %v1023 = vpop.f32.mrb[0].mxu0
    %v1024 = vadd.f32 0.0, %v1023
    %v1025 = vpop.f32.mrb[0].mxu0
    %v1026 = vpop.f32.mrb[0].mxu0
    %v1027 = vadd.f32 0.0, %v1026
    %v1028 = vpop.f32.mrb[0].mxu0
    %1029 = vmatprep.mubr.bf16.mxu0 0
    %1030 = vmatmul.mubr.bf16.gmra.mrb[0].mxu0 %v976
    %v1031 = vpop.f32.mrb[0].mxu0
    %v1032 = vadd.f32 0.0, %v1031
    %v1033 = vpop.f32.mrb[0].mxu0
    %v1034 = vpop.f32.mrb[0].mxu0
    %v1035 = vadd.f32 0.0, %v1034
    %v1036 = vpop.f32.mrb[0].mxu0
    %1037 = vmatprep.mubr.bf16.mxu0 0
    %1038 = vmatmul.mubr.bf16.gmra.mrb[0].mxu0 %v979
    %v1039 = vpop.f32.mrb[0].mxu0
    %v1040 = vadd.f32 0.0, %v1039
    %v1041 = vpop.f32.mrb[0].mxu0
    %v1042 = vpop.f32.mrb[0].mxu0
    %v1043 = vadd.f32 0.0, %v1042
    %v1044 = vpop.f32.mrb[0].mxu0
    %1045 = vdwg.mxu0
    %v1047 = vsel %vm242, %v787, 0
    %v1050 = vsel %vm242, %v788, 0
    %v1053 = vsel %vm242, %v789, 0
    %v1056 = vsel %vm242, %v790, 0
    %1058 = vmatprep.subr.bf16.mxu0 0
    %1059 = vmatpush1.bf16.msra.mxu0 %v813
    %1060 = vmatprep.subr.bf16.mxu0 0
    %1061 = vmatpush1.bf16.msra.mxu0 0
    %1062 = vmatprep.subr.bf16.mxu0 0
    %1063 = vmatpush1.bf16.msra.mxu0 0
    %1064 = vmatprep.subr.bf16.mxu0 0
    %1065 = vmatpush1.bf16.msra.mxu0 0
    %1066 = vmatprep.subr.bf16.mxu0 0
    %1067 = vmatpush1.bf16.msra.mxu0 0
    %1068 = vmatprep.subr.bf16.mxu0 0
    %1069 = vmatpush1.bf16.msra.mxu0 0
    %1070 = vmatprep.subr.bf16.mxu0 0
    %1071 = vmatpush1.bf16.msra.mxu0 0
    %1072 = vmatprep.subr.bf16.mxu0 0
    %1073 = vmatpush1.bf16.msra.mxu0 0
    %1074 = vmatprep.subr.bf16.mxu0 0
    %1075 = vmatpush1.bf16.msra.mxu0 0
    %1076 = vmatprep.subr.bf16.mxu0 0
    %1077 = vmatpush1.bf16.msra.mxu0 0
    %1078 = vmatprep.subr.bf16.mxu0 0
    %1079 = vmatpush1.bf16.msra.mxu0 0
    %1080 = vmatprep.subr.bf16.mxu0 0
    %1081 = vmatpush1.bf16.msra.mxu0 0
    %1082 = vmatprep.subr.bf16.mxu0 0
    %1083 = vmatpush1.bf16.msra.mxu0 0
    %1084 = vmatprep.subr.bf16.mxu0 0
    %1085 = vmatpush1.bf16.msra.mxu0 0
    %1086 = vmatprep.subr.bf16.mxu0 0
    %1087 = vmatpush1.bf16.msra.mxu0 0
    %1088 = vmatprep.subr.bf16.mxu0 0
    %1089 = vmatpush1.bf16.msra.mxu0 0
    %1090 = vmatprep.mubr.bf16.mxu0 0
    %1091 = vmatmul.mubr.bf16.gmra.mrb[0].mxu0 %v1047
    %v1092 = vpop.f32.mrb[0].mxu0
    %v1093 = vadd.f32 0.0, %v1092
    %v1094 = vpop.f32.mrb[0].mxu0
    %v1095 = vpop.f32.mrb[0].mxu0
    %v1096 = vadd.f32 0.0, %v1095
    %v1097 = vpop.f32.mrb[0].mxu0
    %1098 = vmatprep.mubr.bf16.mxu0 0
    %1099 = vmatmul.mubr.bf16.gmra.mrb[0].mxu0 %v1050
    %v1100 = vpop.f32.mrb[0].mxu0
    %v1101 = vadd.f32 0.0, %v1100
    %v1102 = vpop.f32.mrb[0].mxu0
    %v1103 = vpop.f32.mrb[0].mxu0
    %v1104 = vadd.f32 0.0, %v1103
    %v1105 = vpop.f32.mrb[0].mxu0
    %1106 = vmatprep.mubr.bf16.mxu0 0
    %1107 = vmatmul.mubr.bf16.gmra.mrb[0].mxu0 %v1053
    %v1108 = vpop.f32.mrb[0].mxu0
    %v1109 = vadd.f32 0.0, %v1108
    %v1110 = vpop.f32.mrb[0].mxu0
    %v1111 = vpop.f32.mrb[0].mxu0
    %v1112 = vadd.f32 0.0, %v1111
    %v1113 = vpop.f32.mrb[0].mxu0
    %1114 = vmatprep.mubr.bf16.mxu0 0
    %1115 = vmatmul.mubr.bf16.gmra.mrb[0].mxu0 %v1056
    %v1116 = vpop.f32.mrb[0].mxu0
    %v1117 = vadd.f32 0.0, %v1116
    %v1118 = vpop.f32.mrb[0].mxu0
    %v1119 = vpop.f32.mrb[0].mxu0
    %v1120 = vadd.f32 0.0, %v1119
    %v1121 = vpop.f32.mrb[0].mxu0
    %1122 = vdwg.mxu0
    %v1124 = vsel %vm242, %v791, 0
    %v1127 = vsel %vm242, %v792, 0
    %v1130 = vsel %vm242, %v793, 0
    %v1133 = vsel %vm242, %v794, 0
    %1135 = vmatprep.subr.bf16.mxu0 0
    %1136 = vmatpush1.bf16.msra.mxu0 %v813
    %1137 = vmatprep.subr.bf16.mxu0 0
    %1138 = vmatpush1.bf16.msra.mxu0 0
    %1139 = vmatprep.subr.bf16.mxu0 0
    %1140 = vmatpush1.bf16.msra.mxu0 0
    %1141 = vmatprep.subr.bf16.mxu0 0
    %1142 = vmatpush1.bf16.msra.mxu0 0
    %1143 = vmatprep.subr.bf16.mxu0 0
    %1144 = vmatpush1.bf16.msra.mxu0 0
    %1145 = vmatprep.subr.bf16.mxu0 0
    %1146 = vmatpush1.bf16.msra.mxu0 0
    %1147 = vmatprep.subr.bf16.mxu0 0
    %1148 = vmatpush1.bf16.msra.mxu0 0
    %1149 = vmatprep.subr.bf16.mxu0 0
    %1150 = vmatpush1.bf16.msra.mxu0 0
    %1151 = vmatprep.subr.bf16.mxu0 0
    %1152 = vmatpush1.bf16.msra.mxu0 0
    %1153 = vmatprep.subr.bf16.mxu0 0
    %1154 = vmatpush1.bf16.msra.mxu0 0
    %1155 = vmatprep.subr.bf16.mxu0 0
    %1156 = vmatpush1.bf16.msra.mxu0 0
    %1157 = vmatprep.subr.bf16.mxu0 0
    %1158 = vmatpush1.bf16.msra.mxu0 0
    %1159 = vmatprep.subr.bf16.mxu0 0
    %1160 = vmatpush1.bf16.msra.mxu0 0
    %1161 = vmatprep.subr.bf16.mxu0 0
    %1162 = vmatpush1.bf16.msra.mxu0 0
    %1163 = vmatprep.subr.bf16.mxu0 0
    %1164 = vmatpush1.bf16.msra.mxu0 0
    %1165 = vmatprep.subr.bf16.mxu0 0
    %1166 = vmatpush1.bf16.msra.mxu0 0
    %1167 = vmatprep.mubr.bf16.mxu0 0
    %1168 = vmatmul.mubr.bf16.gmra.mrb[0].mxu0 %v1124
    %v1169 = vpop.f32.mrb[0].mxu0
    %v1170 = vadd.f32 0.0, %v1169
    %v1171 = vpop.f32.mrb[0].mxu0
    %v1172 = vpop.f32.mrb[0].mxu0
    %v1173 = vadd.f32 0.0, %v1172
    %v1174 = vpop.f32.mrb[0].mxu0
    %1175 = vmatprep.mubr.bf16.mxu0 0
    %1176 = vmatmul.mubr.bf16.gmra.mrb[0].mxu0 %v1127
    %v1177 = vpop.f32.mrb[0].mxu0
    %v1178 = vadd.f32 0.0, %v1177
    %v1179 = vpop.f32.mrb[0].mxu0
    %v1180 = vpop.f32.mrb[0].mxu0
    %v1181 = vadd.f32 0.0, %v1180
    %v1182 = vpop.f32.mrb[0].mxu0
    %1183 = vmatprep.mubr.bf16.mxu0 0
    %1184 = vmatmul.mubr.bf16.gmra.mrb[0].mxu0 %v1130
    %v1185 = vpop.f32.mrb[0].mxu0
    %v1186 = vadd.f32 0.0, %v1185
    %v1187 = vpop.f32.mrb[0].mxu0
    %v1188 = vpop.f32.mrb[0].mxu0
    %v1189 = vadd.f32 0.0, %v1188
    %v1190 = vpop.f32.mrb[0].mxu0
    %1191 = vmatprep.mubr.bf16.mxu0 0
    %1192 = vmatmul.mubr.bf16.gmra.mrb[0].mxu0 %v1133
    %v1193 = vpop.f32.mrb[0].mxu0
    %v1194 = vadd.f32 0.0, %v1193
    %v1195 = vpop.f32.mrb[0].mxu0
    %v1196 = vpop.f32.mrb[0].mxu0
    %v1197 = vadd.f32 0.0, %v1196
    %v1198 = vpop.f32.mrb[0].mxu0
    %1199 = vdwg.mxu0
    %v1201 = vsel %vm242, %v795, 0
    %v1204 = vsel %vm242, %v796, 0
    %v1207 = vsel %vm242, %v797, 0
    %v1210 = vsel %vm242, %v798, 0
    %1212 = vmatprep.subr.bf16.mxu0 0
    %1213 = vmatpush1.bf16.msra.mxu0 %v813
    %1214 = vmatprep.subr.bf16.mxu0 0
    %1215 = vmatpush1.bf16.msra.mxu0 0
    %1216 = vmatprep.subr.bf16.mxu0 0
    %1217 = vmatpush1.bf16.msra.mxu0 0
    %1218 = vmatprep.subr.bf16.mxu0 0
    %1219 = vmatpush1.bf16.msra.mxu0 0
    %1220 = vmatprep.subr.bf16.mxu0 0
    %1221 = vmatpush1.bf16.msra.mxu0 0
    %1222 = vmatprep.subr.bf16.mxu0 0
    %1223 = vmatpush1.bf16.msra.mxu0 0
    %1224 = vmatprep.subr.bf16.mxu0 0
    %1225 = vmatpush1.bf16.msra.mxu0 0
    %1226 = vmatprep.subr.bf16.mxu0 0
    %1227 = vmatpush1.bf16.msra.mxu0 0
    %1228 = vmatprep.subr.bf16.mxu0 0
    %1229 = vmatpush1.bf16.msra.mxu0 0
    %1230 = vmatprep.subr.bf16.mxu0 0
    %1231 = vmatpush1.bf16.msra.mxu0 0
    %1232 = vmatprep.subr.bf16.mxu0 0
    %1233 = vmatpush1.bf16.msra.mxu0 0
    %1234 = vmatprep.subr.bf16.mxu0 0
    %1235 = vmatpush1.bf16.msra.mxu0 0
    %1236 = vmatprep.subr.bf16.mxu0 0
    %1237 = vmatpush1.bf16.msra.mxu0 0
    %1238 = vmatprep.subr.bf16.mxu0 0
    %1239 = vmatpush1.bf16.msra.mxu0 0
    %1240 = vmatprep.subr.bf16.mxu0 0
    %1241 = vmatpush1.bf16.msra.mxu0 0
    %1242 = vmatprep.subr.bf16.mxu0 0
    %1243 = vmatpush1.bf16.msra.mxu0 0
    %1244 = vmatprep.mubr.bf16.mxu0 0
    %1245 = vmatmul.mubr.bf16.gmra.mrb[0].mxu0 %v1201
    %v1246 = vpop.f32.mrb[0].mxu0
    %v1247 = vadd.f32 0.0, %v1246
    %v1248 = vpop.f32.mrb[0].mxu0
    %v1249 = vpop.f32.mrb[0].mxu0
    %v1250 = vadd.f32 0.0, %v1249
    %v1251 = vpop.f32.mrb[0].mxu0
    %1252 = vmatprep.mubr.bf16.mxu0 0
    %1253 = vmatmul.mubr.bf16.gmra.mrb[0].mxu0 %v1204
    %v1254 = vpop.f32.mrb[0].mxu0
    %v1255 = vadd.f32 0.0, %v1254
    %v1256 = vpop.f32.mrb[0].mxu0
    %v1257 = vpop.f32.mrb[0].mxu0
    %v1258 = vadd.f32 0.0, %v1257
    %v1259 = vpop.f32.mrb[0].mxu0
    %1260 = vmatprep.mubr.bf16.mxu0 0
    %1261 = vmatmul.mubr.bf16.gmra.mrb[0].mxu0 %v1207
    %v1262 = vpop.f32.mrb[0].mxu0
    %v1263 = vadd.f32 0.0, %v1262
    %v1264 = vpop.f32.mrb[0].mxu0
    %v1265 = vpop.f32.mrb[0].mxu0
    %v1266 = vadd.f32 0.0, %v1265
    %v1267 = vpop.f32.mrb[0].mxu0
    %1268 = vmatprep.mubr.bf16.mxu0 0
    %1269 = vmatmul.mubr.bf16.gmra.mrb[0].mxu0 %v1210
    %v1270 = vpop.f32.mrb[0].mxu0
    %v1271 = vadd.f32 0.0, %v1270
    %v1272 = vpop.f32.mrb[0].mxu0
    %v1273 = vpop.f32.mrb[0].mxu0
    %v1274 = vadd.f32 0.0, %v1273
    %v1275 = vpop.f32.mrb[0].mxu0
    %1276 = vdwg.mxu0
    %v1278 = vsel %vm242, %v799, 0
    %v1281 = vsel %vm242, %v800, 0
    %v1284 = vsel %vm242, %v801, 0
    %v1287 = vsel %vm242, %v802, 0
    %1289 = vmatprep.subr.bf16.mxu0 0
    %1290 = vmatpush1.bf16.msra.mxu0 %v813
    %1291 = vmatprep.subr.bf16.mxu0 0
    %1292 = vmatpush1.bf16.msra.mxu0 0
    %1293 = vmatprep.subr.bf16.mxu0 0
    %1294 = vmatpush1.bf16.msra.mxu0 0
    %1295 = vmatprep.subr.bf16.mxu0 0
    %1296 = vmatpush1.bf16.msra.mxu0 0
    %1297 = vmatprep.subr.bf16.mxu0 0
    %1298 = vmatpush1.bf16.msra.mxu0 0
    %1299 = vmatprep.subr.bf16.mxu0 0
    %1300 = vmatpush1.bf16.msra.mxu0 0
    %1301 = vmatprep.subr.bf16.mxu0 0
    %1302 = vmatpush1.bf16.msra.mxu0 0
    %1303 = vmatprep.subr.bf16.mxu0 0
    %1304 = vmatpush1.bf16.msra.mxu0 0
    %1305 = vmatprep.subr.bf16.mxu0 0
    %1306 = vmatpush1.bf16.msra.mxu0 0
    %1307 = vmatprep.subr.bf16.mxu0 0
    %1308 = vmatpush1.bf16.msra.mxu0 0
    %1309 = vmatprep.subr.bf16.mxu0 0
    %1310 = vmatpush1.bf16.msra.mxu0 0
    %1311 = vmatprep.subr.bf16.mxu0 0
    %1312 = vmatpush1.bf16.msra.mxu0 0
    %1313 = vmatprep.subr.bf16.mxu0 0
    %1314 = vmatpush1.bf16.msra.mxu0 0
    %1315 = vmatprep.subr.bf16.mxu0 0
    %1316 = vmatpush1.bf16.msra.mxu0 0
    %1317 = vmatprep.subr.bf16.mxu0 0
    %1318 = vmatpush1.bf16.msra.mxu0 0
    %1319 = vmatprep.subr.bf16.mxu0 0
    %1320 = vmatpush1.bf16.msra.mxu0 0
    %1321 = vmatprep.mubr.bf16.mxu0 0
    %1322 = vmatmul.mubr.bf16.gmra.mrb[0].mxu0 %v1278
    %v1323 = vpop.f32.mrb[0].mxu0
    %v1324 = vadd.f32 0.0, %v1323
    %v1325 = vpop.f32.mrb[0].mxu0
    %v1326 = vpop.f32.mrb[0].mxu0
    %v1327 = vadd.f32 0.0, %v1326
    %v1328 = vpop.f32.mrb[0].mxu0
    %1329 = vmatprep.mubr.bf16.mxu0 0
    %1330 = vmatmul.mubr.bf16.gmra.mrb[0].mxu0 %v1281
    %v1331 = vpop.f32.mrb[0].mxu0
    %v1332 = vadd.f32 0.0, %v1331
    %v1333 = vpop.f32.mrb[0].mxu0
    %v1334 = vpop.f32.mrb[0].mxu0
    %v1335 = vadd.f32 0.0, %v1334
    %v1336 = vpop.f32.mrb[0].mxu0
    %1337 = vmatprep.mubr.bf16.mxu0 0
    %1338 = vmatmul.mubr.bf16.gmra.mrb[0].mxu0 %v1284
    %v1339 = vpop.f32.mrb[0].mxu0
    %v1340 = vadd.f32 0.0, %v1339
    %v1341 = vpop.f32.mrb[0].mxu0
    %v1342 = vpop.f32.mrb[0].mxu0
    %v1343 = vadd.f32 0.0, %v1342
    %v1344 = vpop.f32.mrb[0].mxu0
    %1345 = vmatprep.mubr.bf16.mxu0 0
    %1346 = vmatmul.mubr.bf16.gmra.mrb[0].mxu0 %v1287
    %v1347 = vpop.f32.mrb[0].mxu0
    %v1348 = vadd.f32 0.0, %v1347
    %v1349 = vpop.f32.mrb[0].mxu0
    %v1350 = vpop.f32.mrb[0].mxu0
    %v1351 = vadd.f32 0.0, %v1350
    %v1352 = vpop.f32.mrb[0].mxu0
    %1353 = vdwg.mxu0
    %v1355 = vsel %vm242, %v803, 0
    %v1358 = vsel %vm242, %v804, 0
    %v1361 = vsel %vm242, %v805, 0
    %v1364 = vsel %vm242, %v806, 0
    %1366 = vmatprep.subr.bf16.mxu0 0
    %1367 = vmatpush1.bf16.msra.mxu0 %v813
    %1368 = vmatprep.subr.bf16.mxu0 0
    %1369 = vmatpush1.bf16.msra.mxu0 0
    %1370 = vmatprep.subr.bf16.mxu0 0
    %1371 = vmatpush1.bf16.msra.mxu0 0
    %1372 = vmatprep.subr.bf16.mxu0 0
    %1373 = vmatpush1.bf16.msra.mxu0 0
    %1374 = vmatprep.subr.bf16.mxu0 0
    %1375 = vmatpush1.bf16.msra.mxu0 0
    %1376 = vmatprep.subr.bf16.mxu0 0
    %1377 = vmatpush1.bf16.msra.mxu0 0
    %1378 = vmatprep.subr.bf16.mxu0 0
    %1379 = vmatpush1.bf16.msra.mxu0 0
    %1380 = vmatprep.subr.bf16.mxu0 0
    %1381 = vmatpush1.bf16.msra.mxu0 0
    %1382 = vmatprep.subr.bf16.mxu0 0
    %1383 = vmatpush1.bf16.msra.mxu0 0
    %1384 = vmatprep.subr.bf16.mxu0 0
    %1385 = vmatpush1.bf16.msra.mxu0 0
    %1386 = vmatprep.subr.bf16.mxu0 0
    %1387 = vmatpush1.bf16.msra.mxu0 0
    %1388 = vmatprep.subr.bf16.mxu0 0
    %1389 = vmatpush1.bf16.msra.mxu0 0
    %1390 = vmatprep.subr.bf16.mxu0 0
    %1391 = vmatpush1.bf16.msra.mxu0 0
    %1392 = vmatprep.subr.bf16.mxu0 0
    %1393 = vmatpush1.bf16.msra.mxu0 0
    %1394 = vmatprep.subr.bf16.mxu0 0
    %1395 = vmatpush1.bf16.msra.mxu0 0
    %1396 = vmatprep.subr.bf16.mxu0 0
    %1397 = vmatpush1.bf16.msra.mxu0 0
    %1398 = vmatprep.mubr.bf16.mxu0 0
    %1399 = vmatmul.mubr.bf16.gmra.mrb[0].mxu0 %v1355
    %v1400 = vpop.f32.mrb[0].mxu0
    %v1401 = vadd.f32 0.0, %v1400
    %v1402 = vpop.f32.mrb[0].mxu0
    %v1403 = vpop.f32.mrb[0].mxu0
    %v1404 = vadd.f32 0.0, %v1403
    %v1405 = vpop.f32.mrb[0].mxu0
    %1406 = vmatprep.mubr.bf16.mxu0 0
    %1407 = vmatmul.mubr.bf16.gmra.mrb[0].mxu0 %v1358
    %v1408 = vpop.f32.mrb[0].mxu0
    %v1409 = vadd.f32 0.0, %v1408
    %v1410 = vpop.f32.mrb[0].mxu0
    %v1411 = vpop.f32.mrb[0].mxu0
    %v1412 = vadd.f32 0.0, %v1411
    %v1413 = vpop.f32.mrb[0].mxu0
    %1414 = vmatprep.mubr.bf16.mxu0 0
    %1415 = vmatmul.mubr.bf16.gmra.mrb[0].mxu0 %v1361
    %v1416 = vpop.f32.mrb[0].mxu0
    %v1417 = vadd.f32 0.0, %v1416
    %v1418 = vpop.f32.mrb[0].mxu0
    %v1419 = vpop.f32.mrb[0].mxu0
    %v1420 = vadd.f32 0.0, %v1419
    %v1421 = vpop.f32.mrb[0].mxu0
    %1422 = vmatprep.mubr.bf16.mxu0 0
    %1423 = vmatmul.mubr.bf16.gmra.mrb[0].mxu0 %v1364
    %v1424 = vpop.f32.mrb[0].mxu0
    %v1425 = vadd.f32 0.0, %v1424
    %v1426 = vpop.f32.mrb[0].mxu0
    %v1427 = vpop.f32.mrb[0].mxu0
    %v1428 = vadd.f32 0.0, %v1427
    %v1429 = vpop.f32.mrb[0].mxu0
    %1430 = vdwg.mxu0
    %vm1431 = vcmask 523264
    %1432 = vst.msk [vmem:[#allocation7] sm:$0xff] %vm1431, %v862
    %1433 = vst.msk [vmem:[#allocation7 + $0x8] sm:$0xff] %vm1431, %v865
    %1434 = vst.msk [vmem:[#allocation7 + $0x10] sm:$0xff] %vm1431, %v870
    %1435 = vst.msk [vmem:[#allocation7 + $0x18] sm:$0xff] %vm1431, %v873
    %1436 = vst.msk [vmem:[#allocation7 + $0x20] sm:$0xff] %vm1431, %v878
    %1437 = vst.msk [vmem:[#allocation7 + $0x28] sm:$0xff] %vm1431, %v881
    %1438 = vst.msk [vmem:[#allocation7 + $0x30] sm:$0xff] %vm1431, %v886
    %1439 = vst.msk [vmem:[#allocation7 + $0x38] sm:$0xff] %vm1431, %v889
    %1440 = vst.msk [vmem:[#allocation7 + $0x40] sm:$0xff] %vm1431, %v939
    %1441 = vst.msk [vmem:[#allocation7 + $0x48] sm:$0xff] %vm1431, %v942
    %1442 = vst.msk [vmem:[#allocation7 + $0x50] sm:$0xff] %vm1431, %v947
    %1443 = vst.msk [vmem:[#allocation7 + $0x58] sm:$0xff] %vm1431, %v950
    %1444 = vst.msk [vmem:[#allocation7 + $0x60] sm:$0xff] %vm1431, %v955
    %1445 = vst.msk [vmem:[#allocation7 + $0x68] sm:$0xff] %vm1431, %v958
    %1446 = vst.msk [vmem:[#allocation7 + $0x70] sm:$0xff] %vm1431, %v963
    %1447 = vst.msk [vmem:[#allocation7 + $0x78] sm:$0xff] %vm1431, %v966
    %1448 = vst.msk [vmem:[#allocation7 + $0x80] sm:$0xff] %vm1431, %v1016
    %1449 = vst.msk [vmem:[#allocation7 + $0x88] sm:$0xff] %vm1431, %v1019
    %1450 = vst.msk [vmem:[#allocation7 + $0x90] sm:$0xff] %vm1431, %v1024
    %1451 = vst.msk [vmem:[#allocation7 + $0x98] sm:$0xff] %vm1431, %v1027
    %1452 = vst.msk [vmem:[#allocation7 + $0xa0] sm:$0xff] %vm1431, %v1032
    %1453 = vst.msk [vmem:[#allocation7 + $0xa8] sm:$0xff] %vm1431, %v1035
    %1454 = vst.msk [vmem:[#allocation7 + $0xb0] sm:$0xff] %vm1431, %v1040
    %1455 = vst.msk [vmem:[#allocation7 + $0xb8] sm:$0xff] %vm1431, %v1043
    %1456 = vst.msk [vmem:[#allocation7 + $0xc0] sm:$0xff] %vm1431, %v1093
    %1457 = vst.msk [vmem:[#allocation7 + $0xc8] sm:$0xff] %vm1431, %v1096
    %1458 = vst.msk [vmem:[#allocation7 + $0xd0] sm:$0xff] %vm1431, %v1101
    %1459 = vst.msk [vmem:[#allocation7 + $0xd8] sm:$0xff] %vm1431, %v1104
    %1460 = vst.msk [vmem:[#allocation7 + $0xe0] sm:$0xff] %vm1431, %v1109
    %1461 = vst.msk [vmem:[#allocation7 + $0xe8] sm:$0xff] %vm1431, %v1112
    %1462 = vst.msk [vmem:[#allocation7 + $0xf0] sm:$0xff] %vm1431, %v1117
    %1463 = vst.msk [vmem:[#allocation7 + $0xf8] sm:$0xff] %vm1431, %v1120
    %1464 = vst.msk [vmem:[#allocation7 + $0x100] sm:$0xff] %vm1431, %v1170
    %1465 = vst.msk [vmem:[#allocation7 + $0x108] sm:$0xff] %vm1431, %v1173
    %1466 = vst.msk [vmem:[#allocation7 + $0x110] sm:$0xff] %vm1431, %v1178
    %1467 = vst.msk [vmem:[#allocation7 + $0x118] sm:$0xff] %vm1431, %v1181
    %1468 = vst.msk [vmem:[#allocation7 + $0x120] sm:$0xff] %vm1431, %v1186
    %1469 = vst.msk [vmem:[#allocation7 + $0x128] sm:$0xff] %vm1431, %v1189
    %1470 = vst.msk [vmem:[#allocation7 + $0x130] sm:$0xff] %vm1431, %v1194
    %1471 = vst.msk [vmem:[#allocation7 + $0x138] sm:$0xff] %vm1431, %v1197
    %1472 = vst.msk [vmem:[#allocation7 + $0x140] sm:$0xff] %vm1431, %v1247
    %1473 = vst.msk [vmem:[#allocation7 + $0x148] sm:$0xff] %vm1431, %v1250
    %1474 = vst.msk [vmem:[#allocation7 + $0x150] sm:$0xff] %vm1431, %v1255
    %1475 = vst.msk [vmem:[#allocation7 + $0x158] sm:$0xff] %vm1431, %v1258
    %1476 = vst.msk [vmem:[#allocation7 + $0x160] sm:$0xff] %vm1431, %v1263
    %1477 = vst.msk [vmem:[#allocation7 + $0x168] sm:$0xff] %vm1431, %v1266
    %1478 = vst.msk [vmem:[#allocation7 + $0x170] sm:$0xff] %vm1431, %v1271
    %1479 = vst.msk [vmem:[#allocation7 + $0x178] sm:$0xff] %vm1431, %v1274
    %1480 = vst.msk [vmem:[#allocation7 + $0x180] sm:$0xff] %vm1431, %v1324
    %1481 = vst.msk [vmem:[#allocation7 + $0x188] sm:$0xff] %vm1431, %v1327
    %1482 = vst.msk [vmem:[#allocation7 + $0x190] sm:$0xff] %vm1431, %v1332
    %1483 = vst.msk [vmem:[#allocation7 + $0x198] sm:$0xff] %vm1431, %v1335
    %1484 = vst.msk [vmem:[#allocation7 + $0x1a0] sm:$0xff] %vm1431, %v1340
    %1485 = vst.msk [vmem:[#allocation7 + $0x1a8] sm:$0xff] %vm1431, %v1343
    %1486 = vst.msk [vmem:[#allocation7 + $0x1b0] sm:$0xff] %vm1431, %v1348
    %1487 = vst.msk [vmem:[#allocation7 + $0x1b8] sm:$0xff] %vm1431, %v1351
    %1488 = vst.msk [vmem:[#allocation7 + $0x1c0] sm:$0xff] %vm1431, %v1401
    %1489 = vst.msk [vmem:[#allocation7 + $0x1c8] sm:$0xff] %vm1431, %v1404
    %1490 = vst.msk [vmem:[#allocation7 + $0x1d0] sm:$0xff] %vm1431, %v1409
    %1491 = vst.msk [vmem:[#allocation7 + $0x1d8] sm:$0xff] %vm1431, %v1412
    %1492 = vst.msk [vmem:[#allocation7 + $0x1e0] sm:$0xff] %vm1431, %v1417
    %1493 = vst.msk [vmem:[#allocation7 + $0x1e8] sm:$0xff] %vm1431, %v1420
    %1494 = vst.msk [vmem:[#allocation7 + $0x1f0] sm:$0xff] %vm1431, %v1425
    %1495 = vst.msk [vmem:[#allocation7 + $0x1f8] sm:$0xff] %vm1431, %v1428
    // Predicated region
    $region26: #{tpu_custom_call.1} parent=1 // pred_check
      _
    $region27: #{tpu_custom_call.1} parent=1 // pred_check_branch
      %1497 = sbr.rel (0) target = $region29
    $region28: #{tpu_custom_call.1} parent=1 // pred_region
      %s1499 = ssub.s32 8192, 8192
      %1500 = vsyncadd [#allocation4], %s1499
      %s1501 = sshll.u32 [#allocation7], 4
      %s1502 = int_to_ptr.vmem [resolvable:$true] %s1501
      %1507 = dma.vmem_to_hbm [thread:$0]  %s1502, 8192, %s4, [#allocation4], 128, 128, 8
    $region29: #{tpu_custom_call.1} parent=1 // pred_fallthru
      _
    // Predicated region
    $region30: #{tpu_custom_call.1} parent=1 // pred_check
      _
    $region31: #{tpu_custom_call.1} parent=1 // pred_check_branch
      %1509 = sbr.rel (0) target = $region33
    $region32: #{tpu_custom_call.1} parent=1 // pred_region
      %1510 = dma.done [#allocation4], 8192
    $region33: #{tpu_custom_call.1} parent=1 // pred_fallthru
      _
    %1511 = vsyncpa [#allocation3], 1
    %1512 = vsyncpa [#allocation4], 1
    %1513 = vsyncpa [#allocation5], 1

</llo_original>
